<compile_context>
chip_gen: v7x
topology: tpu7x:2x2x1
jax: 0.10.0
libtpu: 0.0.40
codegen_flags: <defaults>
</compile_context>

<pallas_src>
import functools

import jax
import jax.numpy as jnp
from jax.experimental import pallas as pl
from jax.experimental.pallas import tpu as pltpu

_NEG = -1e30  # additive mask value for invalid conv positions


# ----------------------------- Pallas kernel --------------------------------
def _cnn_disc_kernel(ws_max, x_ref, wconv_ref, mask_ref, wfc_ref, bfc_ref, out_ref):
    """conv (per-tap MXU accumulation) -> masked max-pool -> ReLU -> FC (lane-dense)."""
    bb = out_ref.shape[0]                  # batch rows in this block
    lp, nf3p = mask_ref.shape              # padded conv positions, padded 3*n_filter
    e = x_ref.shape[-1]

    # Convolution as ws_max per-tap matmuls accumulated in f32 (bf16 MXU operands):
    #   acc[b*lp + p, c] = sum_k x[b, p + k, :] @ W_k[:, c]
    acc = jnp.dot(x_ref[:, 0:lp, :].reshape(bb * lp, e), wconv_ref[0],
                  preferred_element_type=jnp.float32)               # (bb*lp, nf3p)
    for k in range(1, ws_max):
        xk = x_ref[:, k:k + lp, :].reshape(bb * lp, e)
        acc = acc + jnp.dot(xk, wconv_ref[k], preferred_element_type=jnp.float32)

    # Mask invalid / padded positions (mask already carries the conv bias), then
    # global max-pool over sequence positions and ReLU.
    acc = acc.reshape(bb, lp, nf3p) + mask_ref[...][None, :, :]      # (bb, lp, nf3p)
    pooled = jnp.max(acc, axis=1)                                    # (bb, nf3p)
    h = jnp.maximum(pooled, 0.0).astype(jnp.bfloat16)

    # Fused FC over the concatenated pooled features; lane-dense (bb, 128k) output.
    out_ref[...] = (jnp.dot(h, wfc_ref[...], preferred_element_type=jnp.float32)
                    + bfc_ref[...])


# ----------------------- one-time parameter preparation ----------------------
def prepare_params(params):
    """Fuse / pad / bf16-cast the parameters once; the call path only pads the text."""
    convs = params['convs']
    wfc, bfc = params['fc']

    window_sizes = [int(w.shape[0]) for w, _ in convs]
    ws_max = max(window_sizes)
    E = int(convs[0][0].shape[1])
    F = int(convs[0][0].shape[2])
    NF3 = len(convs) * F
    NF3P = pl.cdiv(NF3, 128) * 128          # lane-dense channel width
    NO = pl.cdiv(1 + E, 128) * 128          # lane-dense FC output width
    assert wfc.shape == (NF3, 1 + E)

    # Per-tap fused conv weights: (ws_max, E, NF3P). Windows shorter than ws_max get
    # zero taps; padded channels get zero columns.
    w_fused = jnp.concatenate(
        [jnp.pad(w.astype(jnp.float32), ((0, ws_max - ws), (0, 0), (0, 0)))
         for (w, _), ws in zip(convs, window_sizes)], axis=-1)
    w_fused = jnp.pad(w_fused, ((0, 0), (0, 0), (0, NF3P - NF3))).astype(jnp.bfloat16)

    # Conv bias (folded into the position mask at call time); zeros for padded channels.
    b_cat = jnp.pad(
        jnp.concatenate([jnp.reshape(b, (-1,)).astype(jnp.float32) for _, b in convs]),
        (0, NF3P - NF3))

    # Per-channel window size (padded channels -> 1; they pool to bias 0 = 0 and feed
    # zero FC rows anyway).
    ws_ch = jnp.pad(
        jnp.concatenate([jnp.full((F,), ws, jnp.int32) for ws in window_sizes]),
        (0, NF3P - NF3), constant_values=1)

    # FC weights/bias padded to lane-dense widths; zero rows for padded channels.
    wfc_p = jnp.pad(wfc.astype(jnp.float32),
                    ((0, NF3P - NF3), (0, NO - (1 + E)))).astype(jnp.bfloat16)
    bfc_p = jnp.pad(jnp.reshape(bfc, (-1,)).astype(jnp.float32),
                    (0, NO - (1 + E)))[None, :]

    return {'w_fused': w_fused, 'b_cat': b_cat, 'ws_ch': ws_ch,
            'wfc': wfc_p, 'bfc': bfc_p}


# ------------------------------ forward wrapper -------------------------------
@functools.partial(jax.jit, static_argnames=("block_b",))
def cnn_discriminator_forward(text, prepared, *, block_b=256):
    """text: (B, L, E) float32. Returns (sigmoid(out[:, 0]) shape (B,), out[:, 1:] shape (B, E))."""
    B, L, E = text.shape
    w_fused = prepared['w_fused']
    ws_max, e_w, nf3p = (int(d) for d in w_fused.shape)
    no = int(prepared['wfc'].shape[1])
    assert E == e_w, "embedding dim mismatch with prepared params"
    assert L >= ws_max, "sequence shorter than the largest conv window"

    # Static geometry (padded for TPU tiling / lane density).
    lout_pad = pl.cdiv(L, 16) * 16               # >= L - ws_min + 1, multiple of 16
    L_in = lout_pad + ws_max - 1                 # padded input length fed to kernel

    # Batch tile: multiple of 8, large enough to amortize per-step overhead, but
    # capped so the "parallel" grid keeps >= 2 steps (both v7x TCs busy) when B allows.
    block_b = max(8, (int(block_b) // 8) * 8)
    b_ceil8 = pl.cdiv(B, 8) * 8
    cap = max(8, pl.cdiv(b_ceil8 // 2, 8) * 8)
    block_b = min(block_b, cap)
    B_pad = pl.cdiv(B, block_b) * block_b
    grid = (B_pad // block_b,)

    # Only per-call data prep: bf16 cast + zero-pad of the text block.
    xb = jnp.pad(text.astype(jnp.bfloat16),
                 ((0, B_pad - B), (0, L_in - L), (0, 0)))            # (B_pad, L_in, E)

    # Additive position mask with the conv bias folded in:
    #   valid position -> bias, invalid / padded position -> -inf (+ bias).
    pos = jnp.arange(lout_pad, dtype=jnp.int32)[:, None]             # (Lp, 1)
    valid_len = (L - prepared['ws_ch'] + 1)[None, :]                  # (1, NF3P)
    mask = (jnp.where(pos < valid_len, 0.0, _NEG)
            + prepared['b_cat'][None, :]).astype(jnp.float32)         # (Lp, NF3P)

    out_pad = pl.pallas_call(
        functools.partial(_cnn_disc_kernel, ws_max),
        grid=grid,
        in_specs=[
            pl.BlockSpec((block_b, L_in, E), lambda i: (i, 0, 0)),    # padded text
            pl.BlockSpec((ws_max, E, nf3p), lambda i: (0, 0, 0)),     # fused conv W
            pl.BlockSpec((lout_pad, nf3p), lambda i: (0, 0)),         # mask (+ bias)
            pl.BlockSpec((nf3p, no), lambda i: (0, 0)),               # FC W (padded)
            pl.BlockSpec((1, no), lambda i: (0, 0)),                  # FC bias
        ],
        out_specs=pl.BlockSpec((block_b, no), lambda i: (i, 0)),
        out_shape=jax.ShapeDtypeStruct((B_pad, no), jnp.float32),
        compiler_params=pltpu.CompilerParams(
            # batch axis shards across both TensorCores on v7x; harmless on v5e/v6e.
            dimension_semantics=("parallel",)),
    )(xb, w_fused, mask, prepared['wfc'], prepared['bfc'])

    out = out_pad[:B]
    return jax.nn.sigmoid(out[:, 0]), out[:, 1:1 + E]


# ----------------------- deterministic parameter init ------------------------
def init_params(key, emb_dim, n_filter, window_sizes):
    ks = jax.random.split(key, 2 * len(window_sizes) + 2)
    convs = []
    for i, ws in enumerate(window_sizes):
        # PyTorch Conv1d weight is (F, E, ws); stored here pre-transposed as (ws, E, F).
        w = 0.1 * jax.random.normal(ks[2 * i], (ws, emb_dim, n_filter), jnp.float32)
        b = 0.1 * jax.random.normal(ks[2 * i + 1], (n_filter,), jnp.float32)
        convs.append((w, b))
    # PyTorch Linear weight is (1+E, 3F); stored pre-transposed as (3F, 1+E).
    wfc = 0.1 * jax.random.normal(ks[-2],
                                  (len(window_sizes) * n_filter, 1 + emb_dim),
                                  jnp.float32)
    bfc = 0.1 * jax.random.normal(ks[-1], (1 + emb_dim,), jnp.float32)
    return {'convs': convs, 'fc': (wfc, bfc)}


# --------------------------- pure-JAX reference -------------------------------
def reference_forward(text, params):
    B, L, E = text.shape
    pooled = []
    for w, b in params['convs']:
        ws, _, F = w.shape
        lout = L - ws + 1
        acc = jnp.zeros((B, lout, F), jnp.float32)
        for k in range(ws):
            acc = acc + jnp.einsum('ble,ef->blf', text[:, k:k + lout, :], w[k])
        acc = jax.nn.relu(acc + b.reshape(1, 1, F))
        pooled.append(jnp.max(acc, axis=1))
    cat = jnp.concatenate(pooled, axis=1)          # dropout == identity (eval)
    wfc, bfc = params['fc']
    out = cat @ wfc + bfc[None, :]
    return jax.nn.sigmoid(out[:, 0]), out[:, 1:]


# ------------------------------------ main ------------------------------------
if __name__ == "__main__":
    L, emb_dim = 12, 16
    n_filter = 32
    window_sizes = [3, 4, 5]

    key = jax.random.PRNGKey(0)
    k_x1, k_x2, k_p = jax.random.split(key, 3)
    params = init_params(k_p, emb_dim, n_filter, window_sizes)
    prepared = prepare_params(params)

    # bf16 MXU operands -> looser tolerance vs. the f32 reference.
    RTOL, ATOL = 5e-2, 5e-2

    # Case 1: tiny batch (single grid step, block_b capped to 8).
    B1 = 2
    text1 = jax.random.normal(k_x1, (B1, L, emb_dim), jnp.float32)
    prob1, feat1 = jax.block_until_ready(cnn_discriminator_forward(text1, prepared))
    prob1_ref, feat1_ref = reference_forward(text1, params)
    assert prob1.shape == (B1,) and feat1.shape == (B1, emb_dim)
    assert jnp.allclose(prob1, prob1_ref, rtol=RTOL, atol=ATOL)
    assert jnp.allclose(feat1, feat1_ref, rtol=RTOL, atol=ATOL)

    # Case 2: larger batch -> tile cap keeps a 2-step "parallel" grid (padded batch).
    B2 = 20
    text2 = jax.random.normal(k_x2, (B2, L, emb_dim), jnp.float32)
    prob2, feat2 = jax.block_until_ready(cnn_discriminator_forward(text2, prepared))
    prob2_ref, feat2_ref = reference_forward(text2, params)
    assert prob2.shape == (B2,) and feat2.shape == (B2, emb_dim)
    assert jnp.allclose(prob2, prob2_ref, rtol=RTOL, atol=ATOL)
    assert jnp.allclose(feat2, feat2_ref, rtol=RTOL, atol=ATOL)

    print("KERNEL_OK")
</pallas_src>

<mosaic_0001>
module attributes {stable_mosaic.version = 11 : i64} {
  func.func @_cnn_disc_kernel(%arg0: i32, %arg1: memref<8x20x16xbf16, #tpu.memory_space<vmem>>, %arg2: memref<5x16x128xbf16, #tpu.memory_space<vmem>>, %arg3: memref<16x128xf32, #tpu.memory_space<vmem>>, %arg4: memref<128x128xbf16, #tpu.memory_space<vmem>>, %arg5: memref<1x128xf32, #tpu.memory_space<vmem>>, %arg6: memref<8x128xf32, #tpu.memory_space<vmem>>) attributes {dimension_semantics = [#tpu.dimension_semantics<parallel>], iteration_bounds = array<i64: 1>, scalar_prefetch = 0 : i64, scratch_operands = 0 : i64, tpu.core_type = #tpu.core_type<tc>, window_params = [{transform_indices = @transform_0, window_bounds = array<i64: 8, 20, 16>}, {pipeline_mode = #tpu.pipeline_mode<synchronous>, transform_indices = @transform_1, window_bounds = array<i64: 5, 16, 128>}, {pipeline_mode = #tpu.pipeline_mode<synchronous>, transform_indices = @transform_2, window_bounds = array<i64: 16, 128>}, {pipeline_mode = #tpu.pipeline_mode<synchronous>, transform_indices = @transform_3, window_bounds = array<i64: 128, 128>}, {pipeline_mode = #tpu.pipeline_mode<synchronous>, transform_indices = @transform_4, window_bounds = array<i64: 1, 128>}, {transform_indices = @transform_5, window_bounds = array<i64: 8, 128>}]} {
    %c0 = arith.constant 0 : index
    %c0_0 = arith.constant 0 : index
    %c0_1 = arith.constant 0 : index
    %0 = vector.load %arg1[%c0, %c0_0, %c0_1] : memref<8x20x16xbf16, #tpu.memory_space<vmem>>, vector<8x16x16xbf16>
    %1 = vector.shape_cast %0 : vector<8x16x16xbf16> to vector<128x16xbf16>
    %c0_2 = arith.constant 0 : index
    %c0_3 = arith.constant 0 : index
    %c0_4 = arith.constant 0 : index
    %2 = vector.load %arg2[%c0_2, %c0_3, %c0_4] : memref<5x16x128xbf16, #tpu.memory_space<vmem>>, vector<1x16x128xbf16>
    %3 = vector.shape_cast %2 : vector<1x16x128xbf16> to vector<16x128xbf16>
    %cst = arith.constant dense<0.000000e+00> : vector<128x128xf32>
    %4 = tpu.matmul %1, %3, %cst {dimension_numbers = #tpu.dot_dimension_numbers<[1], [0], [0], [1], [0, 0, 1, 1], [], []>} : vector<128x16xbf16>, vector<16x128xbf16>, vector<128x128xf32> -> vector<128x128xf32>
    %c0_5 = arith.constant 0 : index
    %c1 = arith.constant 1 : index
    %c0_6 = arith.constant 0 : index
    %5 = vector.load %arg1[%c0_5, %c1, %c0_6] : memref<8x20x16xbf16, #tpu.memory_space<vmem>>, vector<8x16x16xbf16>
    %6 = vector.shape_cast %5 : vector<8x16x16xbf16> to vector<128x16xbf16>
    %c1_7 = arith.constant 1 : index
    %c0_8 = arith.constant 0 : index
    %c0_9 = arith.constant 0 : index
    %7 = vector.load %arg2[%c1_7, %c0_8, %c0_9] : memref<5x16x128xbf16, #tpu.memory_space<vmem>>, vector<1x16x128xbf16>
    %8 = vector.shape_cast %7 : vector<1x16x128xbf16> to vector<16x128xbf16>
    %cst_10 = arith.constant dense<0.000000e+00> : vector<128x128xf32>
    %9 = tpu.matmul %6, %8, %cst_10 {dimension_numbers = #tpu.dot_dimension_numbers<[1], [0], [0], [1], [0, 0, 1, 1], [], []>} : vector<128x16xbf16>, vector<16x128xbf16>, vector<128x128xf32> -> vector<128x128xf32>
    %10 = arith.addf %4, %9 : vector<128x128xf32>
    %c0_11 = arith.constant 0 : index
    %c2 = arith.constant 2 : index
    %c0_12 = arith.constant 0 : index
    %11 = vector.load %arg1[%c0_11, %c2, %c0_12] : memref<8x20x16xbf16, #tpu.memory_space<vmem>>, vector<8x16x16xbf16>
    %12 = vector.shape_cast %11 : vector<8x16x16xbf16> to vector<128x16xbf16>
    %c2_13 = arith.constant 2 : index
    %c0_14 = arith.constant 0 : index
    %c0_15 = arith.constant 0 : index
    %13 = vector.load %arg2[%c2_13, %c0_14, %c0_15] : memref<5x16x128xbf16, #tpu.memory_space<vmem>>, vector<1x16x128xbf16>
    %14 = vector.shape_cast %13 : vector<1x16x128xbf16> to vector<16x128xbf16>
    %cst_16 = arith.constant dense<0.000000e+00> : vector<128x128xf32>
    %15 = tpu.matmul %12, %14, %cst_16 {dimension_numbers = #tpu.dot_dimension_numbers<[1], [0], [0], [1], [0, 0, 1, 1], [], []>} : vector<128x16xbf16>, vector<16x128xbf16>, vector<128x128xf32> -> vector<128x128xf32>
    %16 = arith.addf %10, %15 : vector<128x128xf32>
    %c0_17 = arith.constant 0 : index
    %c3 = arith.constant 3 : index
    %c0_18 = arith.constant 0 : index
    %17 = vector.load %arg1[%c0_17, %c3, %c0_18] : memref<8x20x16xbf16, #tpu.memory_space<vmem>>, vector<8x16x16xbf16>
    %18 = vector.shape_cast %17 : vector<8x16x16xbf16> to vector<128x16xbf16>
    %c3_19 = arith.constant 3 : index
    %c0_20 = arith.constant 0 : index
    %c0_21 = arith.constant 0 : index
    %19 = vector.load %arg2[%c3_19, %c0_20, %c0_21] : memref<5x16x128xbf16, #tpu.memory_space<vmem>>, vector<1x16x128xbf16>
    %20 = vector.shape_cast %19 : vector<1x16x128xbf16> to vector<16x128xbf16>
    %cst_22 = arith.constant dense<0.000000e+00> : vector<128x128xf32>
    %21 = tpu.matmul %18, %20, %cst_22 {dimension_numbers = #tpu.dot_dimension_numbers<[1], [0], [0], [1], [0, 0, 1, 1], [], []>} : vector<128x16xbf16>, vector<16x128xbf16>, vector<128x128xf32> -> vector<128x128xf32>
    %22 = arith.addf %16, %21 : vector<128x128xf32>
    %c0_23 = arith.constant 0 : index
    %c4 = arith.constant 4 : index
    %c0_24 = arith.constant 0 : index
    %23 = vector.load %arg1[%c0_23, %c4, %c0_24] : memref<8x20x16xbf16, #tpu.memory_space<vmem>>, vector<8x16x16xbf16>
    %24 = vector.shape_cast %23 : vector<8x16x16xbf16> to vector<128x16xbf16>
    %c4_25 = arith.constant 4 : index
    %c0_26 = arith.constant 0 : index
    %c0_27 = arith.constant 0 : index
    %25 = vector.load %arg2[%c4_25, %c0_26, %c0_27] : memref<5x16x128xbf16, #tpu.memory_space<vmem>>, vector<1x16x128xbf16>
    %26 = vector.shape_cast %25 : vector<1x16x128xbf16> to vector<16x128xbf16>
    %cst_28 = arith.constant dense<0.000000e+00> : vector<128x128xf32>
    %27 = tpu.matmul %24, %26, %cst_28 {dimension_numbers = #tpu.dot_dimension_numbers<[1], [0], [0], [1], [0, 0, 1, 1], [], []>} : vector<128x16xbf16>, vector<16x128xbf16>, vector<128x128xf32> -> vector<128x128xf32>
    %28 = arith.addf %22, %27 : vector<128x128xf32>
    %29 = vector.shape_cast %28 : vector<128x128xf32> to vector<8x16x128xf32>
    %c0_29 = arith.constant 0 : index
    %c0_30 = arith.constant 0 : index
    %30 = vector.load %arg3[%c0_29, %c0_30] : memref<16x128xf32, #tpu.memory_space<vmem>>, vector<16x128xf32>
    %31 = vector.shape_cast %30 : vector<16x128xf32> to vector<1x16x128xf32>
    %32 = vector.broadcast %31 : vector<1x16x128xf32> to vector<8x16x128xf32>
    %33 = arith.addf %29, %32 : vector<8x16x128xf32>
    %cst_31 = arith.constant dense<0xFF800000> : vector<8x128xf32>
    %34 = vector.multi_reduction <maximumf>, %33, %cst_31 [1] : vector<8x16x128xf32> to vector<8x128xf32>
    %cst_32 = arith.constant 0.000000e+00 : f32
    %35 = vector.broadcast %cst_32 : f32 to vector<8x128xf32>
    %36 = arith.maximumf %34, %35 : vector<8x128xf32>
    %37 = arith.truncf %36 : vector<8x128xf32> to vector<8x128xbf16>
    %c0_33 = arith.constant 0 : index
    %c0_34 = arith.constant 0 : index
    %38 = vector.load %arg4[%c0_33, %c0_34] : memref<128x128xbf16, #tpu.memory_space<vmem>>, vector<128x128xbf16>
    %cst_35 = arith.constant dense<0.000000e+00> : vector<8x128xf32>
    %39 = tpu.matmul %37, %38, %cst_35 {dimension_numbers = #tpu.dot_dimension_numbers<[1], [0], [0], [1], [0, 0, 1, 1], [], []>} : vector<8x128xbf16>, vector<128x128xbf16>, vector<8x128xf32> -> vector<8x128xf32>
    %c0_36 = arith.constant 0 : index
    %c0_37 = arith.constant 0 : index
    %40 = vector.load %arg5[%c0_36, %c0_37] : memref<1x128xf32, #tpu.memory_space<vmem>>, vector<1x128xf32>
    %41 = vector.broadcast %40 : vector<1x128xf32> to vector<8x128xf32>
    %42 = arith.addf %39, %41 : vector<8x128xf32>
    %c0_38 = arith.constant 0 : index
    %c0_39 = arith.constant 0 : index
    %43 = vector.load %arg6[%c0_38, %c0_39] : memref<8x128xf32, #tpu.memory_space<vmem>>, vector<8x128xf32>
    tpu.vector_store %arg6[%c0_38, %c0_39], %42 {strides = array<i32>} : memref<8x128xf32, #tpu.memory_space<vmem>>, vector<8x128xf32>,
    return
  }
  func.func @transform_0(%arg0: i32) -> (i32, i32, i32) {
    %c0_i32 = arith.constant 0 : i32
    %c0_i32_0 = arith.constant 0 : i32
    %c0_i32_1 = arith.constant 0 : i32
    return %arg0, %c0_i32, %c0_i32_0 : i32, i32, i32
  }
  func.func @transform_1(%arg0: i32) -> (i32, i32, i32) {
    %c0_i32 = arith.constant 0 : i32
    %c0_i32_0 = arith.constant 0 : i32
    %c0_i32_1 = arith.constant 0 : i32
    %c0_i32_2 = arith.constant 0 : i32
    return %c0_i32, %c0_i32_0, %c0_i32_1 : i32, i32, i32
  }
  func.func @transform_2(%arg0: i32) -> (i32, i32) {
    %c0_i32 = arith.constant 0 : i32
    %c0_i32_0 = arith.constant 0 : i32
    %c0_i32_1 = arith.constant 0 : i32
    return %c0_i32, %c0_i32_0 : i32, i32
  }
  func.func @transform_3(%arg0: i32) -> (i32, i32) {
    %c0_i32 = arith.constant 0 : i32
    %c0_i32_0 = arith.constant 0 : i32
    %c0_i32_1 = arith.constant 0 : i32
    return %c0_i32, %c0_i32_0 : i32, i32
  }
  func.func @transform_4(%arg0: i32) -> (i32, i32) {
    %c0_i32 = arith.constant 0 : i32
    %c0_i32_0 = arith.constant 0 : i32
    %c0_i32_1 = arith.constant 0 : i32
    return %c0_i32, %c0_i32_0 : i32, i32
  }
  func.func @transform_5(%arg0: i32) -> (i32, i32) {
    %c0_i32 = arith.constant 0 : i32
    %c0_i32_0 = arith.constant 0 : i32
    return %arg0, %c0_i32 : i32, i32
  }
}

</mosaic_0001>

<llo_original>
// kernel: cnn_discriminator_forward.1
$region0: #{cnn_discriminator_forward.1}
  #allocation0 [shape = 'u32[]', space=smem, size = 0x4, offset = 0x4, fixed_abs, tag = 'smem constant byte address 0x4 - core index']
  #allocation1 [shape = 'u32[144,128]{1,0:T(1,128)}', space=vmem, size = 0x12000, scoped, tag = 'internal scratch']
  %s0 = inlined_call_operand.vmem [shape: bf16[8,20,16], index: 0, kind: input, shape index: {}]
  %s1 = inlined_call_operand.vmem [shape: bf16[5,16,128], index: 1, kind: input, shape index: {}]
  %s2 = inlined_call_operand.vmem [shape: f32[16,128], index: 2, kind: input, shape index: {}]
  %s3 = inlined_call_operand.vmem [shape: bf16[128,128], index: 3, kind: input, shape index: {}]
  %s4 = inlined_call_operand.vmem [shape: f32[1,128], index: 4, kind: input, shape index: {}]
  %s5 = inlined_call_operand.vmem [shape: f32[8,128], index: 5, kind: output, shape index: {}]
  %s6 = sld [smem:[#allocation0]]
  $region30: #{cnn_discriminator_forward.1} parent=0
    _
  %s8 = ssub.s32 1, %s6
  %s9 = scalar_select 0, %s8, %s6
  // Predicated region
  $region2: #{cnn_discriminator_forward.1} parent=0 // pred_check
    _
  $region3: #{cnn_discriminator_forward.1} parent=0 // pred_check_branch
    %11 = sbr.rel (0) target = $region5
  $region4: #{cnn_discriminator_forward.1} parent=0 // pred_region
    _
  $region5: #{cnn_discriminator_forward.1} parent=0 // pred_fallthru
    _
  // Predicated region
  $region6: #{cnn_discriminator_forward.1} parent=0 // pred_check
    _
  $region7: #{cnn_discriminator_forward.1} parent=0 // pred_check_branch
    %13 = sbr.rel (0) target = $region9
  $region8: #{cnn_discriminator_forward.1} parent=0 // pred_region
    _
  $region9: #{cnn_discriminator_forward.1} parent=0 // pred_fallthru
    _
  // Predicated region
  $region10: #{cnn_discriminator_forward.1} parent=0 // pred_check
    _
  $region11: #{cnn_discriminator_forward.1} parent=0 // pred_check_branch
    %15 = sbr.rel (0) target = $region13
  $region12: #{cnn_discriminator_forward.1} parent=0 // pred_region
    _
  $region13: #{cnn_discriminator_forward.1} parent=0 // pred_fallthru
    _
  // Predicated region
  $region14: #{cnn_discriminator_forward.1} parent=0 // pred_check
    _
  $region15: #{cnn_discriminator_forward.1} parent=0 // pred_check_branch
    %17 = sbr.rel (0) target = $region17
  $region16: #{cnn_discriminator_forward.1} parent=0 // pred_region
    _
  $region17: #{cnn_discriminator_forward.1} parent=0 // pred_fallthru
    _
  // Predicated region
  $region18: #{cnn_discriminator_forward.1} parent=0 // pred_check
    _
  $region19: #{cnn_discriminator_forward.1} parent=0 // pred_check_branch
    %19 = sbr.rel (0) target = $region21
  $region20: #{cnn_discriminator_forward.1} parent=0 // pred_region
    _
  $region21: #{cnn_discriminator_forward.1} parent=0 // pred_fallthru
    _
  %v21 = vld [vmem:[%s0] sm:$0xf]
  %v22 = vld [vmem:[%s0 + $0x4] sm:$0xf]
  %v23 = vld [vmem:[%s0 + $0xc] sm:$0xf]
  %v24 = vld [vmem:[%s0 + $0x10] sm:$0xf]
  %v25 = vld [vmem:[%s0 + $0x18] sm:$0xf]
  %v26 = vld [vmem:[%s0 + $0x1c] sm:$0xf]
  %v27 = vld [vmem:[%s0 + $0x24] sm:$0xf]
  %v28 = vld [vmem:[%s0 + $0x28] sm:$0xf]
  %v29 = vld [vmem:[%s0 + $0x30] sm:$0xf]
  %v30 = vld [vmem:[%s0 + $0x34] sm:$0xf]
  %v31 = vld [vmem:[%s0 + $0x3c] sm:$0xf]
  %v32 = vld [vmem:[%s0 + $0x40] sm:$0xf]
  %v33 = vld [vmem:[%s0 + $0x48] sm:$0xf]
  %v34 = vld [vmem:[%s0 + $0x4c] sm:$0xf]
  %v35 = vld [vmem:[%s0 + $0x54] sm:$0xf]
  %v36 = vld [vmem:[%s0 + $0x58] sm:$0xf]
  %v37 = vld [vmem:[%s1] sm:$0xf]
  %v38 = vld [vmem:[%s1 + $0x4] sm:$0xf]
  %v39 = vld [vmem:[%s0 + $0x8] sm:$0x1]
  %v40 = vld [vmem:[%s0 + $0x14] sm:$0x1]
  %v41 = vld [vmem:[%s0 + $0x20] sm:$0x1]
  %v42 = vld [vmem:[%s0 + $0x2c] sm:$0x1]
  %v43 = vld [vmem:[%s0 + $0x38] sm:$0x1]
  %v44 = vld [vmem:[%s0 + $0x44] sm:$0x1]
  %v45 = vld [vmem:[%s0 + $0x50] sm:$0x1]
  %v46 = vld [vmem:[%s0 + $0x5c] sm:$0x1]
  %vm47 = vsmask.f32 3328
  %vm48 = vsmask.f32 7440
  %vm49 = vmor %vm47, %vm48
  %v51 = vshrl.u32 %v21, 16
  %v53 = vrot.slane %v51, 4
  %v54 = vshll.u32 %v21, 16
  %v56 = vrot.slane %v54, 5
  %v57 = vor.u32 %v53, %v56
  %v58 = vrot.slane %v57, 4
  %v60 = vshll.u32 %v22, 16
  %v62 = vrot.slane %v60, 5
  %v63 = vsel %vm49, %v58, %v62
  %v64 = vshrl.u32 %v22, 16
  %v66 = vrot.slane %v64, 4
  %v67 = vor.u32 %v66, %v62
  %v68 = vrot.slane %v67, 4
  %v70 = vshll.u32 %v39, 16
  %v72 = vrot.slane %v70, 5
  %v73 = vsel %vm49, %v68, %v72
  %v75 = vshrl.u32 %v23, 16
  %v77 = vrot.slane %v75, 4
  %v78 = vshll.u32 %v23, 16
  %v80 = vrot.slane %v78, 5
  %v81 = vor.u32 %v77, %v80
  %v82 = vrot.slane %v81, 4
  %v84 = vshll.u32 %v24, 16
  %v86 = vrot.slane %v84, 5
  %v87 = vsel %vm49, %v82, %v86
  %v88 = vshrl.u32 %v24, 16
  %v90 = vrot.slane %v88, 4
  %v91 = vor.u32 %v90, %v86
  %v92 = vrot.slane %v91, 4
  %v94 = vshll.u32 %v40, 16
  %v96 = vrot.slane %v94, 5
  %v97 = vsel %vm49, %v92, %v96
  %v99 = vshrl.u32 %v25, 16
  %v101 = vrot.slane %v99, 4
  %v102 = vshll.u32 %v25, 16
  %v104 = vrot.slane %v102, 5
  %v105 = vor.u32 %v101, %v104
  %v106 = vrot.slane %v105, 4
  %v108 = vshll.u32 %v26, 16
  %v110 = vrot.slane %v108, 5
  %v111 = vsel %vm49, %v106, %v110
  %v112 = vshrl.u32 %v26, 16
  %v114 = vrot.slane %v112, 4
  %v115 = vor.u32 %v114, %v110
  %v116 = vrot.slane %v115, 4
  %v118 = vshll.u32 %v41, 16
  %v120 = vrot.slane %v118, 5
  %v121 = vsel %vm49, %v116, %v120
  %v123 = vshrl.u32 %v27, 16
  %v125 = vrot.slane %v123, 4
  %v126 = vshll.u32 %v27, 16
  %v128 = vrot.slane %v126, 5
  %v129 = vor.u32 %v125, %v128
  %v130 = vrot.slane %v129, 4
  %v132 = vshll.u32 %v28, 16
  %v134 = vrot.slane %v132, 5
  %v135 = vsel %vm49, %v130, %v134
  %v136 = vshrl.u32 %v28, 16
  %v138 = vrot.slane %v136, 4
  %v139 = vor.u32 %v138, %v134
  %v140 = vrot.slane %v139, 4
  %v142 = vshll.u32 %v42, 16
  %v144 = vrot.slane %v142, 5
  %v145 = vsel %vm49, %v140, %v144
  %v147 = vshrl.u32 %v29, 16
  %v149 = vrot.slane %v147, 4
  %v150 = vshll.u32 %v29, 16
  %v152 = vrot.slane %v150, 5
  %v153 = vor.u32 %v149, %v152
  %v154 = vrot.slane %v153, 4
  %v156 = vshll.u32 %v30, 16
  %v158 = vrot.slane %v156, 5
  %v159 = vsel %vm49, %v154, %v158
  %v160 = vshrl.u32 %v30, 16
  %v162 = vrot.slane %v160, 4
  %v163 = vor.u32 %v162, %v158
  %v164 = vrot.slane %v163, 4
  %v166 = vshll.u32 %v43, 16
  %v168 = vrot.slane %v166, 5
  %v169 = vsel %vm49, %v164, %v168
  %v171 = vshrl.u32 %v31, 16
  %v173 = vrot.slane %v171, 4
  %v174 = vshll.u32 %v31, 16
  %v176 = vrot.slane %v174, 5
  %v177 = vor.u32 %v173, %v176
  %v178 = vrot.slane %v177, 4
  %v180 = vshll.u32 %v32, 16
  %v182 = vrot.slane %v180, 5
  %v183 = vsel %vm49, %v178, %v182
  %v184 = vshrl.u32 %v32, 16
  %v186 = vrot.slane %v184, 4
  %v187 = vor.u32 %v186, %v182
  %v188 = vrot.slane %v187, 4
  %v190 = vshll.u32 %v44, 16
  %v192 = vrot.slane %v190, 5
  %v193 = vsel %vm49, %v188, %v192
  %v195 = vshrl.u32 %v33, 16
  %v197 = vrot.slane %v195, 4
  %v198 = vshll.u32 %v33, 16
  %v200 = vrot.slane %v198, 5
  %v201 = vor.u32 %v197, %v200
  %v202 = vrot.slane %v201, 4
  %v204 = vshll.u32 %v34, 16
  %v206 = vrot.slane %v204, 5
  %v207 = vsel %vm49, %v202, %v206
  %v208 = vshrl.u32 %v34, 16
  %v210 = vrot.slane %v208, 4
  %v211 = vor.u32 %v210, %v206
  %v212 = vrot.slane %v211, 4
  %v214 = vshll.u32 %v45, 16
  %v216 = vrot.slane %v214, 5
  %v217 = vsel %vm49, %v212, %v216
  %v219 = vshrl.u32 %v35, 16
  %v221 = vrot.slane %v219, 4
  %v222 = vshll.u32 %v35, 16
  %v224 = vrot.slane %v222, 5
  %v225 = vor.u32 %v221, %v224
  %v226 = vrot.slane %v225, 4
  %v228 = vshll.u32 %v36, 16
  %v230 = vrot.slane %v228, 5
  %v231 = vsel %vm49, %v226, %v230
  %v232 = vshrl.u32 %v36, 16
  %v234 = vrot.slane %v232, 4
  %v235 = vor.u32 %v234, %v230
  %v236 = vrot.slane %v235, 4
  %v238 = vshll.u32 %v46, 16
  %v240 = vrot.slane %v238, 5
  %v241 = vsel %vm49, %v236, %v240
  %s242 = scalar_lea.vmem %s1, 8
  %v243 = vld [vmem:[%s242] sm:$0xf]
  %v244 = vld [vmem:[%s242 + $0x4] sm:$0xf]
  %v245 = vunpack.c.l.b16 %v63
  %v246 = vunpack.c.l.b16 %v73
  %v247 = vunpack.c.l.b16 %v87
  %v248 = vunpack.c.l.b16 %v97
  %v249 = vunpack.c.l.b16 %v111
  %v250 = vunpack.c.l.b16 %v121
  %v251 = vunpack.c.l.b16 %v135
  %v252 = vunpack.c.l.b16 %v145
  %v253 = vunpack.c.l.b16 %v159
  %v254 = vunpack.c.l.b16 %v169
  %v255 = vunpack.c.l.b16 %v183
  %v256 = vunpack.c.l.b16 %v193
  %v257 = vunpack.c.l.b16 %v207
  %v258 = vunpack.c.l.b16 %v217
  %v259 = vunpack.c.l.b16 %v231
  %v260 = vunpack.c.l.b16 %v241
  %v261 = vpack.c.b16 %v246, %v245
  %v262 = vpack.c.b16 %v248, %v247
  %v263 = vpack.c.b16 %v250, %v249
  %v264 = vpack.c.b16 %v252, %v251
  %v265 = vpack.c.b16 %v254, %v253
  %v266 = vpack.c.b16 %v256, %v255
  %v267 = vpack.c.b16 %v258, %v257
  %v268 = vpack.c.b16 %v260, %v259
  %v271 = vunpack.c.l.b16 %v243
  %v272 = vunpack.c.l.b16 %v244
  %v273 = vpack.c.b16 %v272, %v271
  %vm275 = vcmask 130048
  %v277 = vsel %vm275, %v261, 0
  %v280 = vsel %vm275, %v262, 0
  %v283 = vsel %vm275, %v263, 0
  %v286 = vsel %vm275, %v264, 0
  %v289 = vsel %vm275, %v265, 0
  %v292 = vsel %vm275, %v266, 0
  %v295 = vsel %vm275, %v267, 0
  %v298 = vsel %vm275, %v268, 0
  %300 = vmatprep.subr.bf16.mxu0 0
  %301 = vmatpush1.bf16.msra.mxu0 %v273
  %302 = vmatprep.subr.bf16.mxu0 0
  %303 = vmatpush1.bf16.msra.mxu0 0
  %304 = vmatprep.subr.bf16.mxu0 0
  %305 = vmatpush1.bf16.msra.mxu0 0
  %306 = vmatprep.subr.bf16.mxu0 0
  %307 = vmatpush1.bf16.msra.mxu0 0
  %308 = vmatprep.subr.bf16.mxu0 0
  %309 = vmatpush1.bf16.msra.mxu0 0
  %310 = vmatprep.subr.bf16.mxu0 0
  %311 = vmatpush1.bf16.msra.mxu0 0
  %312 = vmatprep.subr.bf16.mxu0 0
  %313 = vmatpush1.bf16.msra.mxu0 0
  %314 = vmatprep.subr.bf16.mxu0 0
  %315 = vmatpush1.bf16.msra.mxu0 0
  %316 = vmatprep.subr.bf16.mxu0 0
  %317 = vmatpush1.bf16.msra.mxu0 0
  %318 = vmatprep.subr.bf16.mxu0 0
  %319 = vmatpush1.bf16.msra.mxu0 0
  %320 = vmatprep.subr.bf16.mxu0 0
  %321 = vmatpush1.bf16.msra.mxu0 0
  %322 = vmatprep.subr.bf16.mxu0 0
  %323 = vmatpush1.bf16.msra.mxu0 0
  %324 = vmatprep.subr.bf16.mxu0 0
  %325 = vmatpush1.bf16.msra.mxu0 0
  %326 = vmatprep.subr.bf16.mxu0 0
  %327 = vmatpush1.bf16.msra.mxu0 0
  %328 = vmatprep.subr.bf16.mxu0 0
  %329 = vmatpush1.bf16.msra.mxu0 0
  %330 = vmatprep.subr.bf16.mxu0 0
  %331 = vmatpush1.bf16.msra.mxu0 0
  %332 = vmatprep.mubr.bf16.mxu0 0
  %333 = vmatmul.mubr.bf16.gmra.mrb[0].mxu0 %v277
  %v334 = vpop.f32.mrb[0].mxu0
  %v335 = vadd.f32 0.0, %v334
  %v336 = vpop.f32.mrb[0].mxu0
  %v337 = vpop.f32.mrb[0].mxu0
  %v338 = vadd.f32 0.0, %v337
  %v339 = vpop.f32.mrb[0].mxu0
  %340 = vmatprep.mubr.bf16.mxu0 0
  %341 = vmatmul.mubr.bf16.gmra.mrb[0].mxu0 %v280
  %v342 = vpop.f32.mrb[0].mxu0
  %v343 = vadd.f32 0.0, %v342
  %v344 = vpop.f32.mrb[0].mxu0
  %v345 = vpop.f32.mrb[0].mxu0
  %v346 = vadd.f32 0.0, %v345
  %v347 = vpop.f32.mrb[0].mxu0
  %348 = vmatprep.mubr.bf16.mxu0 0
  %349 = vmatmul.mubr.bf16.gmra.mrb[0].mxu0 %v283
  %v350 = vpop.f32.mrb[0].mxu0
  %v351 = vadd.f32 0.0, %v350
  %v352 = vpop.f32.mrb[0].mxu0
  %v353 = vpop.f32.mrb[0].mxu0
  %v354 = vadd.f32 0.0, %v353
  %v355 = vpop.f32.mrb[0].mxu0
  %356 = vmatprep.mubr.bf16.mxu0 0
  %357 = vmatmul.mubr.bf16.gmra.mrb[0].mxu0 %v286
  %v358 = vpop.f32.mrb[0].mxu0
  %v359 = vadd.f32 0.0, %v358
  %v360 = vpop.f32.mrb[0].mxu0
  %v361 = vpop.f32.mrb[0].mxu0
  %v362 = vadd.f32 0.0, %v361
  %v363 = vpop.f32.mrb[0].mxu0
  %364 = vmatprep.mubr.bf16.mxu0 0
  %365 = vmatmul.mubr.bf16.gmra.mrb[0].mxu0 %v289
  %v366 = vpop.f32.mrb[0].mxu0
  %v367 = vadd.f32 0.0, %v366
  %v368 = vpop.f32.mrb[0].mxu0
  %v369 = vpop.f32.mrb[0].mxu0
  %v370 = vadd.f32 0.0, %v369
  %v371 = vpop.f32.mrb[0].mxu0
  %372 = vmatprep.mubr.bf16.mxu0 0
  %373 = vmatmul.mubr.bf16.gmra.mrb[0].mxu0 %v292
  %v374 = vpop.f32.mrb[0].mxu0
  %v375 = vadd.f32 0.0, %v374
  %v376 = vpop.f32.mrb[0].mxu0
  %v377 = vpop.f32.mrb[0].mxu0
  %v378 = vadd.f32 0.0, %v377
  %v379 = vpop.f32.mrb[0].mxu0
  %380 = vmatprep.mubr.bf16.mxu0 0
  %381 = vmatmul.mubr.bf16.gmra.mrb[0].mxu0 %v295
  %v382 = vpop.f32.mrb[0].mxu0
  %v383 = vadd.f32 0.0, %v382
  %v384 = vpop.f32.mrb[0].mxu0
  %v385 = vpop.f32.mrb[0].mxu0
  %v386 = vadd.f32 0.0, %v385
  %v387 = vpop.f32.mrb[0].mxu0
  %388 = vmatprep.mubr.bf16.mxu0 0
  %389 = vmatmul.mubr.bf16.gmra.mrb[0].mxu0 %v298
  %v390 = vpop.f32.mrb[0].mxu0
  %v391 = vadd.f32 0.0, %v390
  %v392 = vpop.f32.mrb[0].mxu0
  %v393 = vpop.f32.mrb[0].mxu0
  %v394 = vadd.f32 0.0, %v393
  %v395 = vpop.f32.mrb[0].mxu0
  %396 = vdwg.mxu0
  %v413 = vunpack.c.l.b16 %v21
  %v414 = vunpack.c.l.b16 %v22
  %v415 = vunpack.c.l.b16 %v23
  %v416 = vunpack.c.l.b16 %v24
  %v417 = vunpack.c.l.b16 %v25
  %v418 = vunpack.c.l.b16 %v26
  %v419 = vunpack.c.l.b16 %v27
  %v420 = vunpack.c.l.b16 %v28
  %v421 = vunpack.c.l.b16 %v29
  %v422 = vunpack.c.l.b16 %v30
  %v423 = vunpack.c.l.b16 %v31
  %v424 = vunpack.c.l.b16 %v32
  %v425 = vunpack.c.l.b16 %v33
  %v426 = vunpack.c.l.b16 %v34
  %v427 = vunpack.c.l.b16 %v35
  %v428 = vunpack.c.l.b16 %v36
  %v429 = vpack.c.b16 %v414, %v413
  %v430 = vpack.c.b16 %v416, %v415
  %v431 = vpack.c.b16 %v418, %v417
  %v432 = vpack.c.b16 %v420, %v419
  %v433 = vpack.c.b16 %v422, %v421
  %v434 = vpack.c.b16 %v424, %v423
  %v435 = vpack.c.b16 %v426, %v425
  %v436 = vpack.c.b16 %v428, %v427
  %v439 = vunpack.c.l.b16 %v37
  %v440 = vunpack.c.l.b16 %v38
  %v441 = vpack.c.b16 %v440, %v439
  %v444 = vsel %vm275, %v429, 0
  %v447 = vsel %vm275, %v430, 0
  %v450 = vsel %vm275, %v431, 0
  %v453 = vsel %vm275, %v432, 0
  %v456 = vsel %vm275, %v433, 0
  %v459 = vsel %vm275, %v434, 0
  %v462 = vsel %vm275, %v435, 0
  %v465 = vsel %vm275, %v436, 0
  %467 = vmatprep.subr.bf16.mxu0 0
  %468 = vmatpush1.bf16.msra.mxu0 %v441
  %469 = vmatprep.subr.bf16.mxu0 0
  %470 = vmatpush1.bf16.msra.mxu0 0
  %471 = vmatprep.subr.bf16.mxu0 0
  %472 = vmatpush1.bf16.msra.mxu0 0
  %473 = vmatprep.subr.bf16.mxu0 0
  %474 = vmatpush1.bf16.msra.mxu0 0
  %475 = vmatprep.subr.bf16.mxu0 0
  %476 = vmatpush1.bf16.msra.mxu0 0
  %477 = vmatprep.subr.bf16.mxu0 0
  %478 = vmatpush1.bf16.msra.mxu0 0
  %479 = vmatprep.subr.bf16.mxu0 0
  %480 = vmatpush1.bf16.msra.mxu0 0
  %481 = vmatprep.subr.bf16.mxu0 0
  %482 = vmatpush1.bf16.msra.mxu0 0
  %483 = vmatprep.subr.bf16.mxu0 0
  %484 = vmatpush1.bf16.msra.mxu0 0
  %485 = vmatprep.subr.bf16.mxu0 0
  %486 = vmatpush1.bf16.msra.mxu0 0
  %487 = vmatprep.subr.bf16.mxu0 0
  %488 = vmatpush1.bf16.msra.mxu0 0
  %489 = vmatprep.subr.bf16.mxu0 0
  %490 = vmatpush1.bf16.msra.mxu0 0
  %491 = vmatprep.subr.bf16.mxu0 0
  %492 = vmatpush1.bf16.msra.mxu0 0
  %493 = vmatprep.subr.bf16.mxu0 0
  %494 = vmatpush1.bf16.msra.mxu0 0
  %495 = vmatprep.subr.bf16.mxu0 0
  %496 = vmatpush1.bf16.msra.mxu0 0
  %497 = vmatprep.subr.bf16.mxu0 0
  %498 = vmatpush1.bf16.msra.mxu0 0
  %499 = vmatprep.mubr.bf16.mxu0 0
  %500 = vmatmul.mubr.bf16.gmra.mrb[0].mxu0 %v444
  %v501 = vpop.f32.mrb[0].mxu0
  %v502 = vadd.f32 %v335, %v501
  %v503 = vpop.f32.mrb[0].mxu0
  %v504 = vpop.f32.mrb[0].mxu0
  %v505 = vadd.f32 %v338, %v504
  %v506 = vpop.f32.mrb[0].mxu0
  %507 = vmatprep.mubr.bf16.mxu0 0
  %508 = vmatmul.mubr.bf16.gmra.mrb[0].mxu0 %v447
  %v509 = vpop.f32.mrb[0].mxu0
  %v510 = vadd.f32 %v343, %v509
  %v511 = vpop.f32.mrb[0].mxu0
  %v512 = vpop.f32.mrb[0].mxu0
  %v513 = vadd.f32 %v346, %v512
  %v514 = vpop.f32.mrb[0].mxu0
  %515 = vmatprep.mubr.bf16.mxu0 0
  %516 = vmatmul.mubr.bf16.gmra.mrb[0].mxu0 %v450
  %v517 = vpop.f32.mrb[0].mxu0
  %v518 = vadd.f32 %v351, %v517
  %v519 = vpop.f32.mrb[0].mxu0
  %v520 = vpop.f32.mrb[0].mxu0
  %v521 = vadd.f32 %v354, %v520
  %v522 = vpop.f32.mrb[0].mxu0
  %523 = vmatprep.mubr.bf16.mxu0 0
  %524 = vmatmul.mubr.bf16.gmra.mrb[0].mxu0 %v453
  %v525 = vpop.f32.mrb[0].mxu0
  %v526 = vadd.f32 %v359, %v525
  %v527 = vpop.f32.mrb[0].mxu0
  %v528 = vpop.f32.mrb[0].mxu0
  %v529 = vadd.f32 %v362, %v528
  %v530 = vpop.f32.mrb[0].mxu0
  %531 = vmatprep.mubr.bf16.mxu0 0
  %532 = vmatmul.mubr.bf16.gmra.mrb[0].mxu0 %v456
  %v533 = vpop.f32.mrb[0].mxu0
  %v534 = vadd.f32 %v367, %v533
  %v535 = vpop.f32.mrb[0].mxu0
  %v536 = vpop.f32.mrb[0].mxu0
  %v537 = vadd.f32 %v370, %v536
  %v538 = vpop.f32.mrb[0].mxu0
  %539 = vmatprep.mubr.bf16.mxu0 0
  %540 = vmatmul.mubr.bf16.gmra.mrb[0].mxu0 %v459
  %v541 = vpop.f32.mrb[0].mxu0
  %v542 = vadd.f32 %v375, %v541
  %v543 = vpop.f32.mrb[0].mxu0
  %v544 = vpop.f32.mrb[0].mxu0
  %v545 = vadd.f32 %v378, %v544
  %v546 = vpop.f32.mrb[0].mxu0
  %547 = vmatprep.mubr.bf16.mxu0 0
  %548 = vmatmul.mubr.bf16.gmra.mrb[0].mxu0 %v462
  %v549 = vpop.f32.mrb[0].mxu0
  %v550 = vadd.f32 %v383, %v549
  %v551 = vpop.f32.mrb[0].mxu0
  %v552 = vpop.f32.mrb[0].mxu0
  %v553 = vadd.f32 %v386, %v552
  %v554 = vpop.f32.mrb[0].mxu0
  %555 = vmatprep.mubr.bf16.mxu0 0
  %556 = vmatmul.mubr.bf16.gmra.mrb[0].mxu0 %v465
  %v557 = vpop.f32.mrb[0].mxu0
  %v558 = vadd.f32 %v391, %v557
  %v559 = vpop.f32.mrb[0].mxu0
  %v560 = vpop.f32.mrb[0].mxu0
  %v561 = vadd.f32 %v394, %v560
  %v562 = vpop.f32.mrb[0].mxu0
  %563 = vdwg.mxu0
  %v564 = vld [vmem:[%s0] sm:$0xe]
  %v565 = vld [vmem:[%s0 + $0xc] sm:$0xe]
  %v566 = vld [vmem:[%s0 + $0x18] sm:$0xe]
  %v567 = vld [vmem:[%s0 + $0x24] sm:$0xe]
  %v568 = vld [vmem:[%s0 + $0x30] sm:$0xe]
  %v569 = vld [vmem:[%s0 + $0x3c] sm:$0xe]
  %v570 = vld [vmem:[%s0 + $0x48] sm:$0xe]
  %v571 = vld [vmem:[%s0 + $0x54] sm:$0xe]
  %vm588 = vcmask 1042432
  %vm589 = vcmask 1046532
  %vm590 = vmor %vm588, %vm589
  %v591 = vrot.slane %v564, 5
  %v592 = vrot.slane %v591, 4
  %v593 = vrot.slane %v22, 5
  %v594 = vsel %vm590, %v592, %v593
  %v595 = vrot.slane %v593, 4
  %v596 = vrot.slane %v39, 5
  %v597 = vsel %vm590, %v595, %v596
  %v598 = vrot.slane %v565, 5
  %v599 = vrot.slane %v598, 4
  %v600 = vrot.slane %v24, 5
  %v601 = vsel %vm590, %v599, %v600
  %v602 = vrot.slane %v600, 4
  %v603 = vrot.slane %v40, 5
  %v604 = vsel %vm590, %v602, %v603
  %v605 = vrot.slane %v566, 5
  %v606 = vrot.slane %v605, 4
  %v607 = vrot.slane %v26, 5
  %v608 = vsel %vm590, %v606, %v607
  %v609 = vrot.slane %v607, 4
  %v610 = vrot.slane %v41, 5
  %v611 = vsel %vm590, %v609, %v610
  %v612 = vrot.slane %v567, 5
  %v613 = vrot.slane %v612, 4
  %v614 = vrot.slane %v28, 5
  %v615 = vsel %vm590, %v613, %v614
  %v616 = vrot.slane %v614, 4
  %v617 = vrot.slane %v42, 5
  %v618 = vsel %vm590, %v616, %v617
  %v619 = vrot.slane %v568, 5
  %v620 = vrot.slane %v619, 4
  %v621 = vrot.slane %v30, 5
  %v622 = vsel %vm590, %v620, %v621
  %v623 = vrot.slane %v621, 4
  %v624 = vrot.slane %v43, 5
  %v625 = vsel %vm590, %v623, %v624
  %v626 = vrot.slane %v569, 5
  %v627 = vrot.slane %v626, 4
  %v628 = vrot.slane %v32, 5
  %v629 = vsel %vm590, %v627, %v628
  %v630 = vrot.slane %v628, 4
  %v631 = vrot.slane %v44, 5
  %v632 = vsel %vm590, %v630, %v631
  %v633 = vrot.slane %v570, 5
  %v634 = vrot.slane %v633, 4
  %v635 = vrot.slane %v34, 5
  %v636 = vsel %vm590, %v634, %v635
  %v637 = vrot.slane %v635, 4
  %v638 = vrot.slane %v45, 5
  %v639 = vsel %vm590, %v637, %v638
  %v640 = vrot.slane %v571, 5
  %v641 = vrot.slane %v640, 4
  %v642 = vrot.slane %v36, 5
  %v643 = vsel %vm590, %v641, %v642
  %v644 = vrot.slane %v642, 4
  %v645 = vrot.slane %v46, 5
  %v646 = vsel %vm590, %v644, %v645
  %s647 = scalar_lea.vmem %s1, 16
  %v648 = vld [vmem:[%s647] sm:$0xf]
  %v649 = vld [vmem:[%s647 + $0x4] sm:$0xf]
  %v650 = vunpack.c.l.b16 %v594
  %v651 = vunpack.c.l.b16 %v597
  %v652 = vunpack.c.l.b16 %v601
  %v653 = vunpack.c.l.b16 %v604
  %v654 = vunpack.c.l.b16 %v608
  %v655 = vunpack.c.l.b16 %v611
  %v656 = vunpack.c.l.b16 %v615
  %v657 = vunpack.c.l.b16 %v618
  %v658 = vunpack.c.l.b16 %v622
  %v659 = vunpack.c.l.b16 %v625
  %v660 = vunpack.c.l.b16 %v629
  %v661 = vunpack.c.l.b16 %v632
  %v662 = vunpack.c.l.b16 %v636
  %v663 = vunpack.c.l.b16 %v639
  %v664 = vunpack.c.l.b16 %v643
  %v665 = vunpack.c.l.b16 %v646
  %v666 = vpack.c.b16 %v651, %v650
  %v667 = vpack.c.b16 %v653, %v652
  %v668 = vpack.c.b16 %v655, %v654
  %v669 = vpack.c.b16 %v657, %v656
  %v670 = vpack.c.b16 %v659, %v658
  %v671 = vpack.c.b16 %v661, %v660
  %v672 = vpack.c.b16 %v663, %v662
  %v673 = vpack.c.b16 %v665, %v664
  %v676 = vunpack.c.l.b16 %v648
  %v677 = vunpack.c.l.b16 %v649
  %v678 = vpack.c.b16 %v677, %v676
  %v681 = vsel %vm275, %v666, 0
  %v684 = vsel %vm275, %v667, 0
  %v687 = vsel %vm275, %v668, 0
  %v690 = vsel %vm275, %v669, 0
  %v693 = vsel %vm275, %v670, 0
  %v696 = vsel %vm275, %v671, 0
  %v699 = vsel %vm275, %v672, 0
  %v702 = vsel %vm275, %v673, 0
  %704 = vmatprep.subr.bf16.mxu0 0
  %705 = vmatpush1.bf16.msra.mxu0 %v678
  %706 = vmatprep.subr.bf16.mxu0 0
  %707 = vmatpush1.bf16.msra.mxu0 0
  %708 = vmatprep.subr.bf16.mxu0 0
  %709 = vmatpush1.bf16.msra.mxu0 0
  %710 = vmatprep.subr.bf16.mxu0 0
  %711 = vmatpush1.bf16.msra.mxu0 0
  %712 = vmatprep.subr.bf16.mxu0 0
  %713 = vmatpush1.bf16.msra.mxu0 0
  %714 = vmatprep.subr.bf16.mxu0 0
  %715 = vmatpush1.bf16.msra.mxu0 0
  %716 = vmatprep.subr.bf16.mxu0 0
  %717 = vmatpush1.bf16.msra.mxu0 0
  %718 = vmatprep.subr.bf16.mxu0 0
  %719 = vmatpush1.bf16.msra.mxu0 0
  %720 = vmatprep.subr.bf16.mxu0 0
  %721 = vmatpush1.bf16.msra.mxu0 0
  %722 = vmatprep.subr.bf16.mxu0 0
  %723 = vmatpush1.bf16.msra.mxu0 0
  %724 = vmatprep.subr.bf16.mxu0 0
  %725 = vmatpush1.bf16.msra.mxu0 0
  %726 = vmatprep.subr.bf16.mxu0 0
  %727 = vmatpush1.bf16.msra.mxu0 0
  %728 = vmatprep.subr.bf16.mxu0 0
  %729 = vmatpush1.bf16.msra.mxu0 0
  %730 = vmatprep.subr.bf16.mxu0 0
  %731 = vmatpush1.bf16.msra.mxu0 0
  %732 = vmatprep.subr.bf16.mxu0 0
  %733 = vmatpush1.bf16.msra.mxu0 0
  %734 = vmatprep.subr.bf16.mxu0 0
  %735 = vmatpush1.bf16.msra.mxu0 0
  %736 = vmatprep.mubr.bf16.mxu0 0
  %737 = vmatmul.mubr.bf16.gmra.mrb[0].mxu0 %v681
  %v738 = vpop.f32.mrb[0].mxu0
  %v739 = vadd.f32 0.0, %v738
  %v740 = vpop.f32.mrb[0].mxu0
  %v741 = vpop.f32.mrb[0].mxu0
  %v742 = vadd.f32 0.0, %v741
  %v743 = vpop.f32.mrb[0].mxu0
  %744 = vmatprep.mubr.bf16.mxu0 0
  %745 = vmatmul.mubr.bf16.gmra.mrb[0].mxu0 %v684
  %v746 = vpop.f32.mrb[0].mxu0
  %v747 = vadd.f32 0.0, %v746
  %v748 = vpop.f32.mrb[0].mxu0
  %v749 = vpop.f32.mrb[0].mxu0
  %v750 = vadd.f32 0.0, %v749
  %v751 = vpop.f32.mrb[0].mxu0
  %752 = vmatprep.mubr.bf16.mxu0 0
  %753 = vmatmul.mubr.bf16.gmra.mrb[0].mxu0 %v687
  %v754 = vpop.f32.mrb[0].mxu0
  %v755 = vadd.f32 0.0, %v754
  %v756 = vpop.f32.mrb[0].mxu0
  %v757 = vpop.f32.mrb[0].mxu0
  %v758 = vadd.f32 0.0, %v757
  %v759 = vpop.f32.mrb[0].mxu0
  %760 = vmatprep.mubr.bf16.mxu0 0
  %761 = vmatmul.mubr.bf16.gmra.mrb[0].mxu0 %v690
  %v762 = vpop.f32.mrb[0].mxu0
  %v763 = vadd.f32 0.0, %v762
  %v764 = vpop.f32.mrb[0].mxu0
  %v765 = vpop.f32.mrb[0].mxu0
  %v766 = vadd.f32 0.0, %v765
  %v767 = vpop.f32.mrb[0].mxu0
  %768 = vmatprep.mubr.bf16.mxu0 0
  %769 = vmatmul.mubr.bf16.gmra.mrb[0].mxu0 %v693
  %v770 = vpop.f32.mrb[0].mxu0
  %v771 = vadd.f32 0.0, %v770
  %v772 = vpop.f32.mrb[0].mxu0
  %v773 = vpop.f32.mrb[0].mxu0
  %v774 = vadd.f32 0.0, %v773
  %v775 = vpop.f32.mrb[0].mxu0
  %776 = vmatprep.mubr.bf16.mxu0 0
  %777 = vmatmul.mubr.bf16.gmra.mrb[0].mxu0 %v696
  %v778 = vpop.f32.mrb[0].mxu0
  %v779 = vadd.f32 0.0, %v778
  %v780 = vpop.f32.mrb[0].mxu0
  %v781 = vpop.f32.mrb[0].mxu0
  %v782 = vadd.f32 0.0, %v781
  %v783 = vpop.f32.mrb[0].mxu0
  %784 = vmatprep.mubr.bf16.mxu0 0
  %785 = vmatmul.mubr.bf16.gmra.mrb[0].mxu0 %v699
  %v786 = vpop.f32.mrb[0].mxu0
  %v787 = vadd.f32 0.0, %v786
  %v788 = vpop.f32.mrb[0].mxu0
  %v789 = vpop.f32.mrb[0].mxu0
  %v790 = vadd.f32 0.0, %v789
  %v791 = vpop.f32.mrb[0].mxu0
  %792 = vmatprep.mubr.bf16.mxu0 0
  %793 = vmatmul.mubr.bf16.gmra.mrb[0].mxu0 %v702
  %v794 = vpop.f32.mrb[0].mxu0
  %v795 = vadd.f32 0.0, %v794
  %v796 = vpop.f32.mrb[0].mxu0
  %v797 = vpop.f32.mrb[0].mxu0
  %v798 = vadd.f32 0.0, %v797
  %v799 = vpop.f32.mrb[0].mxu0
  %800 = vdwg.mxu0
  %v801 = vadd.f32 %v502, %v739
  %v802 = vadd.f32 %v505, %v742
  %v803 = vadd.f32 %v510, %v747
  %v804 = vadd.f32 %v513, %v750
  %v805 = vadd.f32 %v518, %v755
  %v806 = vadd.f32 %v521, %v758
  %v807 = vadd.f32 %v526, %v763
  %v808 = vadd.f32 %v529, %v766
  %v809 = vadd.f32 %v534, %v771
  %v810 = vadd.f32 %v537, %v774
  %v811 = vadd.f32 %v542, %v779
  %v812 = vadd.f32 %v545, %v782
  %v813 = vadd.f32 %v550, %v787
  %v814 = vadd.f32 %v553, %v790
  %v815 = vadd.f32 %v558, %v795
  %v816 = vadd.f32 %v561, %v798
  %v817 = vld [vmem:[%s0 + $0x8] sm:$0x3]
  %v818 = vld [vmem:[%s0 + $0x14] sm:$0x3]
  %v819 = vld [vmem:[%s0 + $0x20] sm:$0x3]
  %v820 = vld [vmem:[%s0 + $0x2c] sm:$0x3]
  %v821 = vld [vmem:[%s0 + $0x38] sm:$0x3]
  %v822 = vld [vmem:[%s0 + $0x44] sm:$0x3]
  %v823 = vld [vmem:[%s0 + $0x50] sm:$0x3]
  %v824 = vld [vmem:[%s0 + $0x5c] sm:$0x3]
  %vm825 = vsmask.f32 2304
  %vm826 = vsmask.f32 6416
  %vm827 = vmor %vm825, %vm826
  %v829 = vshrl.u32 %v564, 16
  %v831 = vrot.slane %v829, 5
  %v832 = vshll.u32 %v564, 16
  %v834 = vrot.slane %v832, 6
  %v835 = vor.u32 %v831, %v834
  %v836 = vrot.slane %v835, 4
  %v837 = vrot.slane %v64, 5
  %v838 = vrot.slane %v60, 6
  %v839 = vor.u32 %v837, %v838
  %v840 = vsel %vm827, %v836, %v839
  %v841 = vrot.slane %v839, 4
  %v843 = vshrl.u32 %v817, 16
  %v845 = vrot.slane %v843, 5
  %v846 = vshll.u32 %v817, 16
  %v848 = vrot.slane %v846, 6
  %v849 = vor.u32 %v845, %v848
  %v850 = vsel %vm827, %v841, %v849
  %v852 = vshrl.u32 %v565, 16
  %v854 = vrot.slane %v852, 5
  %v855 = vshll.u32 %v565, 16
  %v857 = vrot.slane %v855, 6
  %v858 = vor.u32 %v854, %v857
  %v859 = vrot.slane %v858, 4
  %v860 = vrot.slane %v88, 5
  %v861 = vrot.slane %v84, 6
  %v862 = vor.u32 %v860, %v861
  %v863 = vsel %vm827, %v859, %v862
  %v864 = vrot.slane %v862, 4
  %v866 = vshrl.u32 %v818, 16
  %v868 = vrot.slane %v866, 5
  %v869 = vshll.u32 %v818, 16
  %v871 = vrot.slane %v869, 6
  %v872 = vor.u32 %v868, %v871
  %v873 = vsel %vm827, %v864, %v872
  %v875 = vshrl.u32 %v566, 16
  %v877 = vrot.slane %v875, 5
  %v878 = vshll.u32 %v566, 16
  %v880 = vrot.slane %v878, 6
  %v881 = vor.u32 %v877, %v880
  %v882 = vrot.slane %v881, 4
  %v883 = vrot.slane %v112, 5
  %v884 = vrot.slane %v108, 6
  %v885 = vor.u32 %v883, %v884
  %v886 = vsel %vm827, %v882, %v885
  %v887 = vrot.slane %v885, 4
  %v889 = vshrl.u32 %v819, 16
  %v891 = vrot.slane %v889, 5
  %v892 = vshll.u32 %v819, 16
  %v894 = vrot.slane %v892, 6
  %v895 = vor.u32 %v891, %v894
  %v896 = vsel %vm827, %v887, %v895
  %v898 = vshrl.u32 %v567, 16
  %v900 = vrot.slane %v898, 5
  %v901 = vshll.u32 %v567, 16
  %v903 = vrot.slane %v901, 6
  %v904 = vor.u32 %v900, %v903
  %v905 = vrot.slane %v904, 4
  %v906 = vrot.slane %v136, 5
  %v907 = vrot.slane %v132, 6
  %v908 = vor.u32 %v906, %v907
  %v909 = vsel %vm827, %v905, %v908
  %v910 = vrot.slane %v908, 4
  %v912 = vshrl.u32 %v820, 16
  %v914 = vrot.slane %v912, 5
  %v915 = vshll.u32 %v820, 16
  %v917 = vrot.slane %v915, 6
  %v918 = vor.u32 %v914, %v917
  %v919 = vsel %vm827, %v910, %v918
  %v921 = vshrl.u32 %v568, 16
  %v923 = vrot.slane %v921, 5
  %v924 = vshll.u32 %v568, 16
  %v926 = vrot.slane %v924, 6
  %v927 = vor.u32 %v923, %v926
  %v928 = vrot.slane %v927, 4
  %v929 = vrot.slane %v160, 5
  %v930 = vrot.slane %v156, 6
  %v931 = vor.u32 %v929, %v930
  %v932 = vsel %vm827, %v928, %v931
  %v933 = vrot.slane %v931, 4
  %v935 = vshrl.u32 %v821, 16
  %v937 = vrot.slane %v935, 5
  %v938 = vshll.u32 %v821, 16
  %v940 = vrot.slane %v938, 6
  %v941 = vor.u32 %v937, %v940
  %v942 = vsel %vm827, %v933, %v941
  %v944 = vshrl.u32 %v569, 16
  %v946 = vrot.slane %v944, 5
  %v947 = vshll.u32 %v569, 16
  %v949 = vrot.slane %v947, 6
  %v950 = vor.u32 %v946, %v949
  %v951 = vrot.slane %v950, 4
  %v952 = vrot.slane %v184, 5
  %v953 = vrot.slane %v180, 6
  %v954 = vor.u32 %v952, %v953
  %v955 = vsel %vm827, %v951, %v954
  %v956 = vrot.slane %v954, 4
  %v958 = vshrl.u32 %v822, 16
  %v960 = vrot.slane %v958, 5
  %v961 = vshll.u32 %v822, 16
  %v963 = vrot.slane %v961, 6
  %v964 = vor.u32 %v960, %v963
  %v965 = vsel %vm827, %v956, %v964
  %v967 = vshrl.u32 %v570, 16
  %v969 = vrot.slane %v967, 5
  %v970 = vshll.u32 %v570, 16
  %v972 = vrot.slane %v970, 6
  %v973 = vor.u32 %v969, %v972
  %v974 = vrot.slane %v973, 4
  %v975 = vrot.slane %v208, 5
  %v976 = vrot.slane %v204, 6
  %v977 = vor.u32 %v975, %v976
  %v978 = vsel %vm827, %v974, %v977
  %v979 = vrot.slane %v977, 4
  %v981 = vshrl.u32 %v823, 16
  %v983 = vrot.slane %v981, 5
  %v984 = vshll.u32 %v823, 16
  %v986 = vrot.slane %v984, 6
  %v987 = vor.u32 %v983, %v986
  %v988 = vsel %vm827, %v979, %v987
  %v990 = vshrl.u32 %v571, 16
  %v992 = vrot.slane %v990, 5
  %v993 = vshll.u32 %v571, 16
  %v995 = vrot.slane %v993, 6
  %v996 = vor.u32 %v992, %v995
  %v997 = vrot.slane %v996, 4
  %v998 = vrot.slane %v232, 5
  %v999 = vrot.slane %v228, 6
  %v1000 = vor.u32 %v998, %v999
  %v1001 = vsel %vm827, %v997, %v1000
  %v1002 = vrot.slane %v1000, 4
  %v1004 = vshrl.u32 %v824, 16
  %v1006 = vrot.slane %v1004, 5
  %v1007 = vshll.u32 %v824, 16
  %v1009 = vrot.slane %v1007, 6
  %v1010 = vor.u32 %v1006, %v1009
  %v1011 = vsel %vm827, %v1002, %v1010
  %s1012 = scalar_lea.vmem %s1, 24
  %v1013 = vld [vmem:[%s1012] sm:$0xf]
  %v1014 = vld [vmem:[%s1012 + $0x4] sm:$0xf]
  %v1015 = vunpack.c.l.b16 %v840
  %v1016 = vunpack.c.l.b16 %v850
  %v1017 = vunpack.c.l.b16 %v863
  %v1018 = vunpack.c.l.b16 %v873
  %v1019 = vunpack.c.l.b16 %v886
  %v1020 = vunpack.c.l.b16 %v896
  %v1021 = vunpack.c.l.b16 %v909
  %v1022 = vunpack.c.l.b16 %v919
  %v1023 = vunpack.c.l.b16 %v932
  %v1024 = vunpack.c.l.b16 %v942
  %v1025 = vunpack.c.l.b16 %v955
  %v1026 = vunpack.c.l.b16 %v965
  %v1027 = vunpack.c.l.b16 %v978
  %v1028 = vunpack.c.l.b16 %v988
  %v1029 = vunpack.c.l.b16 %v1001
  %v1030 = vunpack.c.l.b16 %v1011
  %v1031 = vpack.c.b16 %v1016, %v1015
  %v1032 = vpack.c.b16 %v1018, %v1017
  %v1033 = vpack.c.b16 %v1020, %v1019
  %v1034 = vpack.c.b16 %v1022, %v1021
  %v1035 = vpack.c.b16 %v1024, %v1023
  %v1036 = vpack.c.b16 %v1026, %v1025
  %v1037 = vpack.c.b16 %v1028, %v1027
  %v1038 = vpack.c.b16 %v1030, %v1029
  %v1041 = vunpack.c.l.b16 %v1013
  %v1042 = vunpack.c.l.b16 %v1014
  %v1043 = vpack.c.b16 %v1042, %v1041
  %v1046 = vsel %vm275, %v1031, 0
  %v1049 = vsel %vm275, %v1032, 0
  %v1052 = vsel %vm275, %v1033, 0
  %v1055 = vsel %vm275, %v1034, 0
  %v1058 = vsel %vm275, %v1035, 0
  %v1061 = vsel %vm275, %v1036, 0
  %v1064 = vsel %vm275, %v1037, 0
  %v1067 = vsel %vm275, %v1038, 0
  %1069 = vmatprep.subr.bf16.mxu0 0
  %1070 = vmatpush1.bf16.msra.mxu0 %v1043
  %1071 = vmatprep.subr.bf16.mxu0 0
  %1072 = vmatpush1.bf16.msra.mxu0 0
  %1073 = vmatprep.subr.bf16.mxu0 0
  %1074 = vmatpush1.bf16.msra.mxu0 0
  %1075 = vmatprep.subr.bf16.mxu0 0
  %1076 = vmatpush1.bf16.msra.mxu0 0
  %1077 = vmatprep.subr.bf16.mxu0 0
  %1078 = vmatpush1.bf16.msra.mxu0 0
  %1079 = vmatprep.subr.bf16.mxu0 0
  %1080 = vmatpush1.bf16.msra.mxu0 0
  %1081 = vmatprep.subr.bf16.mxu0 0
  %1082 = vmatpush1.bf16.msra.mxu0 0
  %1083 = vmatprep.subr.bf16.mxu0 0
  %1084 = vmatpush1.bf16.msra.mxu0 0
  %1085 = vmatprep.subr.bf16.mxu0 0
  %1086 = vmatpush1.bf16.msra.mxu0 0
  %1087 = vmatprep.subr.bf16.mxu0 0
  %1088 = vmatpush1.bf16.msra.mxu0 0
  %1089 = vmatprep.subr.bf16.mxu0 0
  %1090 = vmatpush1.bf16.msra.mxu0 0
  %1091 = vmatprep.subr.bf16.mxu0 0
  %1092 = vmatpush1.bf16.msra.mxu0 0
  %1093 = vmatprep.subr.bf16.mxu0 0
  %1094 = vmatpush1.bf16.msra.mxu0 0
  %1095 = vmatprep.subr.bf16.mxu0 0
  %1096 = vmatpush1.bf16.msra.mxu0 0
  %1097 = vmatprep.subr.bf16.mxu0 0
  %1098 = vmatpush1.bf16.msra.mxu0 0
  %1099 = vmatprep.subr.bf16.mxu0 0
  %1100 = vmatpush1.bf16.msra.mxu0 0
  %1101 = vmatprep.mubr.bf16.mxu0 0
  %1102 = vmatmul.mubr.bf16.gmra.mrb[0].mxu0 %v1046
  %v1103 = vpop.f32.mrb[0].mxu0
  %v1104 = vadd.f32 0.0, %v1103
  %v1105 = vpop.f32.mrb[0].mxu0
  %v1106 = vpop.f32.mrb[0].mxu0
  %v1107 = vadd.f32 0.0, %v1106
  %v1108 = vpop.f32.mrb[0].mxu0
  %1109 = vmatprep.mubr.bf16.mxu0 0
  %1110 = vmatmul.mubr.bf16.gmra.mrb[0].mxu0 %v1049
  %v1111 = vpop.f32.mrb[0].mxu0
  %v1112 = vadd.f32 0.0, %v1111
  %v1113 = vpop.f32.mrb[0].mxu0
  %v1114 = vpop.f32.mrb[0].mxu0
  %v1115 = vadd.f32 0.0, %v1114
  %v1116 = vpop.f32.mrb[0].mxu0
  %1117 = vmatprep.mubr.bf16.mxu0 0
  %1118 = vmatmul.mubr.bf16.gmra.mrb[0].mxu0 %v1052
  %v1119 = vpop.f32.mrb[0].mxu0
  %v1120 = vadd.f32 0.0, %v1119
  %v1121 = vpop.f32.mrb[0].mxu0
  %v1122 = vpop.f32.mrb[0].mxu0
  %v1123 = vadd.f32 0.0, %v1122
  %v1124 = vpop.f32.mrb[0].mxu0
  %1125 = vmatprep.mubr.bf16.mxu0 0
  %1126 = vmatmul.mubr.bf16.gmra.mrb[0].mxu0 %v1055
  %v1127 = vpop.f32.mrb[0].mxu0
  %v1128 = vadd.f32 0.0, %v1127
  %v1129 = vpop.f32.mrb[0].mxu0
  %v1130 = vpop.f32.mrb[0].mxu0
  %v1131 = vadd.f32 0.0, %v1130
  %v1132 = vpop.f32.mrb[0].mxu0
  %1133 = vmatprep.mubr.bf16.mxu0 0
  %1134 = vmatmul.mubr.bf16.gmra.mrb[0].mxu0 %v1058
  %v1135 = vpop.f32.mrb[0].mxu0
  %v1136 = vadd.f32 0.0, %v1135
  %v1137 = vpop.f32.mrb[0].mxu0
  %v1138 = vpop.f32.mrb[0].mxu0
  %v1139 = vadd.f32 0.0, %v1138
  %v1140 = vpop.f32.mrb[0].mxu0
  %1141 = vmatprep.mubr.bf16.mxu0 0
  %1142 = vmatmul.mubr.bf16.gmra.mrb[0].mxu0 %v1061
  %v1143 = vpop.f32.mrb[0].mxu0
  %v1144 = vadd.f32 0.0, %v1143
  %v1145 = vpop.f32.mrb[0].mxu0
  %v1146 = vpop.f32.mrb[0].mxu0
  %v1147 = vadd.f32 0.0, %v1146
  %v1148 = vpop.f32.mrb[0].mxu0
  %1149 = vmatprep.mubr.bf16.mxu0 0
  %1150 = vmatmul.mubr.bf16.gmra.mrb[0].mxu0 %v1064
  %v1151 = vpop.f32.mrb[0].mxu0
  %v1152 = vadd.f32 0.0, %v1151
  %v1153 = vpop.f32.mrb[0].mxu0
  %v1154 = vpop.f32.mrb[0].mxu0
  %v1155 = vadd.f32 0.0, %v1154
  %v1156 = vpop.f32.mrb[0].mxu0
  %1157 = vmatprep.mubr.bf16.mxu0 0
  %1158 = vmatmul.mubr.bf16.gmra.mrb[0].mxu0 %v1067
  %v1159 = vpop.f32.mrb[0].mxu0
  %v1160 = vadd.f32 0.0, %v1159
  %v1161 = vpop.f32.mrb[0].mxu0
  %v1162 = vpop.f32.mrb[0].mxu0
  %v1163 = vadd.f32 0.0, %v1162
  %v1164 = vpop.f32.mrb[0].mxu0
  %1165 = vdwg.mxu0
  %v1166 = vadd.f32 %v801, %v1104
  %v1167 = vadd.f32 %v802, %v1107
  %v1168 = vadd.f32 %v803, %v1112
  %v1169 = vadd.f32 %v804, %v1115
  %v1170 = vadd.f32 %v805, %v1120
  %v1171 = vadd.f32 %v806, %v1123
  %v1172 = vadd.f32 %v807, %v1128
  %v1173 = vadd.f32 %v808, %v1131
  %v1174 = vadd.f32 %v809, %v1136
  %v1175 = vadd.f32 %v810, %v1139
  %v1176 = vadd.f32 %v811, %v1144
  %v1177 = vadd.f32 %v812, %v1147
  %v1178 = vadd.f32 %v813, %v1152
  %v1179 = vadd.f32 %v814, %v1155
  %v1180 = vadd.f32 %v815, %v1160
  %v1181 = vadd.f32 %v816, %v1163
  %v1182 = vld [vmem:[%s0] sm:$0xc]
  %v1183 = vld [vmem:[%s0 + $0xc] sm:$0xc]
  %v1184 = vld [vmem:[%s0 + $0x18] sm:$0xc]
  %v1185 = vld [vmem:[%s0 + $0x24] sm:$0xc]
  %v1186 = vld [vmem:[%s0 + $0x30] sm:$0xc]
  %v1187 = vld [vmem:[%s0 + $0x3c] sm:$0xc]
  %v1188 = vld [vmem:[%s0 + $0x48] sm:$0xc]
  %v1189 = vld [vmem:[%s0 + $0x54] sm:$0xc]
  %vm1206 = vcmask 1041408
  %vm1207 = vcmask 1045508
  %vm1208 = vmor %vm1206, %vm1207
  %v1209 = vrot.slane %v1182, 6
  %v1210 = vrot.slane %v1209, 4
  %v1211 = vrot.slane %v22, 6
  %v1212 = vsel %vm1208, %v1210, %v1211
  %v1213 = vrot.slane %v1211, 4
  %v1214 = vrot.slane %v817, 6
  %v1215 = vsel %vm1208, %v1213, %v1214
  %v1216 = vrot.slane %v1183, 6
  %v1217 = vrot.slane %v1216, 4
  %v1218 = vrot.slane %v24, 6
  %v1219 = vsel %vm1208, %v1217, %v1218
  %v1220 = vrot.slane %v1218, 4
  %v1221 = vrot.slane %v818, 6
  %v1222 = vsel %vm1208, %v1220, %v1221
  %v1223 = vrot.slane %v1184, 6
  %v1224 = vrot.slane %v1223, 4
  %v1225 = vrot.slane %v26, 6
  %v1226 = vsel %vm1208, %v1224, %v1225
  %v1227 = vrot.slane %v1225, 4
  %v1228 = vrot.slane %v819, 6
  %v1229 = vsel %vm1208, %v1227, %v1228
  %v1230 = vrot.slane %v1185, 6
  %v1231 = vrot.slane %v1230, 4
  %v1232 = vrot.slane %v28, 6
  %v1233 = vsel %vm1208, %v1231, %v1232
  %v1234 = vrot.slane %v1232, 4
  %v1235 = vrot.slane %v820, 6
  %v1236 = vsel %vm1208, %v1234, %v1235
  %v1237 = vrot.slane %v1186, 6
  %v1238 = vrot.slane %v1237, 4
  %v1239 = vrot.slane %v30, 6
  %v1240 = vsel %vm1208, %v1238, %v1239
  %v1241 = vrot.slane %v1239, 4
  %v1242 = vrot.slane %v821, 6
  %v1243 = vsel %vm1208, %v1241, %v1242
  %v1244 = vrot.slane %v1187, 6
  %v1245 = vrot.slane %v1244, 4
  %v1246 = vrot.slane %v32, 6
  %v1247 = vsel %vm1208, %v1245, %v1246
  %v1248 = vrot.slane %v1246, 4
  %v1249 = vrot.slane %v822, 6
  %v1250 = vsel %vm1208, %v1248, %v1249
  %v1251 = vrot.slane %v1188, 6
  %v1252 = vrot.slane %v1251, 4
  %v1253 = vrot.slane %v34, 6
  %v1254 = vsel %vm1208, %v1252, %v1253
  %v1255 = vrot.slane %v1253, 4
  %v1256 = vrot.slane %v823, 6
  %v1257 = vsel %vm1208, %v1255, %v1256
  %v1258 = vrot.slane %v1189, 6
  %v1259 = vrot.slane %v1258, 4
  %v1260 = vrot.slane %v36, 6
  %v1261 = vsel %vm1208, %v1259, %v1260
  %v1262 = vrot.slane %v1260, 4
  %v1263 = vrot.slane %v824, 6
  %v1264 = vsel %vm1208, %v1262, %v1263
  %s1265 = scalar_lea.vmem %s1, 32
  %v1266 = vld [vmem:[%s1265] sm:$0xf]
  %v1267 = vld [vmem:[%s1265 + $0x4] sm:$0xf]
  %v1268 = vunpack.c.l.b16 %v1212
  %v1269 = vunpack.c.l.b16 %v1215
  %v1270 = vunpack.c.l.b16 %v1219
  %v1271 = vunpack.c.l.b16 %v1222
  %v1272 = vunpack.c.l.b16 %v1226
  %v1273 = vunpack.c.l.b16 %v1229
  %v1274 = vunpack.c.l.b16 %v1233
  %v1275 = vunpack.c.l.b16 %v1236
  %v1276 = vunpack.c.l.b16 %v1240
  %v1277 = vunpack.c.l.b16 %v1243
  %v1278 = vunpack.c.l.b16 %v1247
  %v1279 = vunpack.c.l.b16 %v1250
  %v1280 = vunpack.c.l.b16 %v1254
  %v1281 = vunpack.c.l.b16 %v1257
  %v1282 = vunpack.c.l.b16 %v1261
  %v1283 = vunpack.c.l.b16 %v1264
  %v1284 = vpack.c.b16 %v1269, %v1268
  %v1285 = vpack.c.b16 %v1271, %v1270
  %v1286 = vpack.c.b16 %v1273, %v1272
  %v1287 = vpack.c.b16 %v1275, %v1274
  %v1288 = vpack.c.b16 %v1277, %v1276
  %v1289 = vpack.c.b16 %v1279, %v1278
  %v1290 = vpack.c.b16 %v1281, %v1280
  %v1291 = vpack.c.b16 %v1283, %v1282
  %v1294 = vunpack.c.l.b16 %v1266
  %v1295 = vunpack.c.l.b16 %v1267
  %v1296 = vpack.c.b16 %v1295, %v1294
  %v1299 = vsel %vm275, %v1284, 0
  %v1302 = vsel %vm275, %v1285, 0
  %v1305 = vsel %vm275, %v1286, 0
  %v1308 = vsel %vm275, %v1287, 0
  %v1311 = vsel %vm275, %v1288, 0
  %v1314 = vsel %vm275, %v1289, 0
  %v1317 = vsel %vm275, %v1290, 0
  %v1320 = vsel %vm275, %v1291, 0
  %1322 = vmatprep.subr.bf16.mxu0 0
  %1323 = vmatpush1.bf16.msra.mxu0 %v1296
  %1324 = vmatprep.subr.bf16.mxu0 0
  %1325 = vmatpush1.bf16.msra.mxu0 0
  %1326 = vmatprep.subr.bf16.mxu0 0
  %1327 = vmatpush1.bf16.msra.mxu0 0
  %1328 = vmatprep.subr.bf16.mxu0 0
  %1329 = vmatpush1.bf16.msra.mxu0 0
  %1330 = vmatprep.subr.bf16.mxu0 0
  %1331 = vmatpush1.bf16.msra.mxu0 0
  %1332 = vmatprep.subr.bf16.mxu0 0
  %1333 = vmatpush1.bf16.msra.mxu0 0
  %1334 = vmatprep.subr.bf16.mxu0 0
  %1335 = vmatpush1.bf16.msra.mxu0 0
  %1336 = vmatprep.subr.bf16.mxu0 0
  %1337 = vmatpush1.bf16.msra.mxu0 0
  %1338 = vmatprep.subr.bf16.mxu0 0
  %1339 = vmatpush1.bf16.msra.mxu0 0
  %1340 = vmatprep.subr.bf16.mxu0 0
  %1341 = vmatpush1.bf16.msra.mxu0 0
  %1342 = vmatprep.subr.bf16.mxu0 0
  %1343 = vmatpush1.bf16.msra.mxu0 0
  %1344 = vmatprep.subr.bf16.mxu0 0
  %1345 = vmatpush1.bf16.msra.mxu0 0
  %1346 = vmatprep.subr.bf16.mxu0 0
  %1347 = vmatpush1.bf16.msra.mxu0 0
  %1348 = vmatprep.subr.bf16.mxu0 0
  %1349 = vmatpush1.bf16.msra.mxu0 0
  %1350 = vmatprep.subr.bf16.mxu0 0
  %1351 = vmatpush1.bf16.msra.mxu0 0
  %1352 = vmatprep.subr.bf16.mxu0 0
  %1353 = vmatpush1.bf16.msra.mxu0 0
  %1354 = vmatprep.mubr.bf16.mxu0 0
  %1355 = vmatmul.mubr.bf16.gmra.mrb[0].mxu0 %v1299
  %v1356 = vpop.f32.mrb[0].mxu0
  %v1357 = vadd.f32 0.0, %v1356
  %v1358 = vpop.f32.mrb[0].mxu0
  %v1359 = vpop.f32.mrb[0].mxu0
  %v1360 = vadd.f32 0.0, %v1359
  %v1361 = vpop.f32.mrb[0].mxu0
  %1362 = vmatprep.mubr.bf16.mxu0 0
  %1363 = vmatmul.mubr.bf16.gmra.mrb[0].mxu0 %v1302
  %v1364 = vpop.f32.mrb[0].mxu0
  %v1365 = vadd.f32 0.0, %v1364
  %v1366 = vpop.f32.mrb[0].mxu0
  %v1367 = vpop.f32.mrb[0].mxu0
  %v1368 = vadd.f32 0.0, %v1367
  %v1369 = vpop.f32.mrb[0].mxu0
  %1370 = vmatprep.mubr.bf16.mxu0 0
  %1371 = vmatmul.mubr.bf16.gmra.mrb[0].mxu0 %v1305
  %v1372 = vpop.f32.mrb[0].mxu0
  %v1373 = vadd.f32 0.0, %v1372
  %v1374 = vpop.f32.mrb[0].mxu0
  %v1375 = vpop.f32.mrb[0].mxu0
  %v1376 = vadd.f32 0.0, %v1375
  %v1377 = vpop.f32.mrb[0].mxu0
  %1378 = vmatprep.mubr.bf16.mxu0 0
  %1379 = vmatmul.mubr.bf16.gmra.mrb[0].mxu0 %v1308
  %v1380 = vpop.f32.mrb[0].mxu0
  %v1381 = vadd.f32 0.0, %v1380
  %v1382 = vpop.f32.mrb[0].mxu0
  %v1383 = vpop.f32.mrb[0].mxu0
  %v1384 = vadd.f32 0.0, %v1383
  %v1385 = vpop.f32.mrb[0].mxu0
  %1386 = vmatprep.mubr.bf16.mxu0 0
  %1387 = vmatmul.mubr.bf16.gmra.mrb[0].mxu0 %v1311
  %v1388 = vpop.f32.mrb[0].mxu0
  %v1389 = vadd.f32 0.0, %v1388
  %v1390 = vpop.f32.mrb[0].mxu0
  %v1391 = vpop.f32.mrb[0].mxu0
  %v1392 = vadd.f32 0.0, %v1391
  %v1393 = vpop.f32.mrb[0].mxu0
  %1394 = vmatprep.mubr.bf16.mxu0 0
  %1395 = vmatmul.mubr.bf16.gmra.mrb[0].mxu0 %v1314
  %v1396 = vpop.f32.mrb[0].mxu0
  %v1397 = vadd.f32 0.0, %v1396
  %v1398 = vpop.f32.mrb[0].mxu0
  %v1399 = vpop.f32.mrb[0].mxu0
  %v1400 = vadd.f32 0.0, %v1399
  %v1401 = vpop.f32.mrb[0].mxu0
  %1402 = vmatprep.mubr.bf16.mxu0 0
  %1403 = vmatmul.mubr.bf16.gmra.mrb[0].mxu0 %v1317
  %v1404 = vpop.f32.mrb[0].mxu0
  %v1405 = vadd.f32 0.0, %v1404
  %v1406 = vpop.f32.mrb[0].mxu0
  %v1407 = vpop.f32.mrb[0].mxu0
  %v1408 = vadd.f32 0.0, %v1407
  %v1409 = vpop.f32.mrb[0].mxu0
  %1410 = vmatprep.mubr.bf16.mxu0 0
  %1411 = vmatmul.mubr.bf16.gmra.mrb[0].mxu0 %v1320
  %v1412 = vpop.f32.mrb[0].mxu0
  %v1413 = vadd.f32 0.0, %v1412
  %v1414 = vpop.f32.mrb[0].mxu0
  %v1415 = vpop.f32.mrb[0].mxu0
  %v1416 = vadd.f32 0.0, %v1415
  %v1417 = vpop.f32.mrb[0].mxu0
  %1418 = vdwg.mxu0
  %v1419 = vadd.f32 %v1166, %v1357
  %v1420 = vadd.f32 %v1167, %v1360
  %v1421 = vadd.f32 %v1168, %v1365
  %v1422 = vadd.f32 %v1169, %v1368
  %v1423 = vadd.f32 %v1170, %v1373
  %v1424 = vadd.f32 %v1171, %v1376
  %v1425 = vadd.f32 %v1172, %v1381
  %v1426 = vadd.f32 %v1173, %v1384
  %v1427 = vadd.f32 %v1174, %v1389
  %v1428 = vadd.f32 %v1175, %v1392
  %v1429 = vadd.f32 %v1176, %v1397
  %v1430 = vadd.f32 %v1177, %v1400
  %v1431 = vadd.f32 %v1178, %v1405
  %v1432 = vadd.f32 %v1179, %v1408
  %v1433 = vadd.f32 %v1180, %v1413
  %v1434 = vadd.f32 %v1181, %v1416
  %v1435 = vld [vmem:[%s2] sm:$0xff]
  %v1436 = vld [vmem:[%s2 + $0x8] sm:$0xff]
  %v1437 = vadd.f32 %v1419, %v1435
  %v1438 = vadd.f32 %v1420, %v1436
  %v1439 = vadd.f32 %v1421, %v1435
  %v1440 = vadd.f32 %v1422, %v1436
  %v1441 = vadd.f32 %v1423, %v1435
  %v1442 = vadd.f32 %v1424, %v1436
  %v1443 = vadd.f32 %v1425, %v1435
  %v1444 = vadd.f32 %v1426, %v1436
  %v1445 = vadd.f32 %v1427, %v1435
  %v1446 = vadd.f32 %v1428, %v1436
  %v1447 = vadd.f32 %v1429, %v1435
  %v1448 = vadd.f32 %v1430, %v1436
  %v1449 = vadd.f32 %v1431, %v1435
  %v1450 = vadd.f32 %v1432, %v1436
  %v1451 = vadd.f32 %v1433, %v1435
  %v1452 = vadd.f32 %v1434, %v1436
  %v1453 = vmax.f32 %v1437, %v1438
  %v1454 = vrot.slane %v1453, 4
  %v1455 = vmax.f32 %v1453, %v1454
  %v1456 = vrot.slane %v1455, 2
  %v1457 = vmax.f32 %v1455, %v1456
  %v1458 = vrot.slane %v1457, 1
  %v1459 = vmax.f32 %v1457, %v1458
  %v1460 = vmax.f32 %v1439, %v1440
  %v1461 = vrot.slane %v1460, 4
  %v1462 = vmax.f32 %v1460, %v1461
  %v1463 = vrot.slane %v1462, 2
  %v1464 = vmax.f32 %v1462, %v1463
  %v1465 = vrot.slane %v1464, 1
  %v1466 = vmax.f32 %v1464, %v1465
  %v1467 = vmax.f32 %v1441, %v1442
  %v1468 = vrot.slane %v1467, 4
  %v1469 = vmax.f32 %v1467, %v1468
  %v1470 = vrot.slane %v1469, 2
  %v1471 = vmax.f32 %v1469, %v1470
  %v1472 = vrot.slane %v1471, 1
  %v1473 = vmax.f32 %v1471, %v1472
  %v1474 = vmax.f32 %v1443, %v1444
  %v1475 = vrot.slane %v1474, 4
  %v1476 = vmax.f32 %v1474, %v1475
  %v1477 = vrot.slane %v1476, 2
  %v1478 = vmax.f32 %v1476, %v1477
  %v1479 = vrot.slane %v1478, 1
  %v1480 = vmax.f32 %v1478, %v1479
  %v1481 = vmax.f32 %v1445, %v1446
  %v1482 = vrot.slane %v1481, 4
  %v1483 = vmax.f32 %v1481, %v1482
  %v1484 = vrot.slane %v1483, 2
  %v1485 = vmax.f32 %v1483, %v1484
  %v1486 = vrot.slane %v1485, 1
  %v1487 = vmax.f32 %v1485, %v1486
  %v1488 = vmax.f32 %v1447, %v1448
  %v1489 = vrot.slane %v1488, 4
  %v1490 = vmax.f32 %v1488, %v1489
  %v1491 = vrot.slane %v1490, 2
  %v1492 = vmax.f32 %v1490, %v1491
  %v1493 = vrot.slane %v1492, 1
  %v1494 = vmax.f32 %v1492, %v1493
  %v1495 = vmax.f32 %v1449, %v1450
  %v1496 = vrot.slane %v1495, 4
  %v1497 = vmax.f32 %v1495, %v1496
  %v1498 = vrot.slane %v1497, 2
  %v1499 = vmax.f32 %v1497, %v1498
  %v1500 = vrot.slane %v1499, 1
  %v1501 = vmax.f32 %v1499, %v1500
  %v1502 = vmax.f32 %v1451, %v1452
  %v1503 = vrot.slane %v1502, 4
  %v1504 = vmax.f32 %v1502, %v1503
  %v1505 = vrot.slane %v1504, 2
  %v1506 = vmax.f32 %v1504, %v1505
  %v1507 = vrot.slane %v1506, 1
  %v1508 = vmax.f32 %v1506, %v1507
  %v1509 = vmax.f32 %v1459, 0.0
  %v1510 = vmax.f32 %v1466, 0.0
  %v1511 = vmax.f32 %v1473, 0.0
  %v1512 = vmax.f32 %v1480, 0.0
  %v1513 = vmax.f32 %v1487, 0.0
  %v1514 = vmax.f32 %v1494, 0.0
  %v1515 = vmax.f32 %v1501, 0.0
  %v1516 = vmax.f32 %v1508, 0.0
  %v1517 = vpack.c.bf16 %v1509, %v1509
  %v1518 = vpack.c.bf16 %v1510, %v1510
  %v1519 = vpack.c.bf16 %v1511, %v1511
  %v1520 = vpack.c.bf16 %v1512, %v1512
  %v1521 = vpack.c.bf16 %v1513, %v1513
  %v1522 = vpack.c.bf16 %v1514, %v1514
  %v1523 = vpack.c.bf16 %v1515, %v1515
  %v1524 = vpack.c.bf16 %v1516, %v1516
  %v1525 = vld [vmem:[%s3] sm:$0xf]
  %v1526 = vld [vmem:[%s3 + $0x4] sm:$0xf]
  %v1527 = vld [vmem:[%s3 + $0x8] sm:$0xf]
  %v1528 = vld [vmem:[%s3 + $0xc] sm:$0xf]
  %v1529 = vld [vmem:[%s3 + $0x10] sm:$0xf]
  %v1530 = vld [vmem:[%s3 + $0x14] sm:$0xf]
  %v1531 = vld [vmem:[%s3 + $0x18] sm:$0xf]
  %v1532 = vld [vmem:[%s3 + $0x1c] sm:$0xf]
  %v1533 = vld [vmem:[%s3 + $0x20] sm:$0xf]
  %v1534 = vld [vmem:[%s3 + $0x24] sm:$0xf]
  %v1535 = vld [vmem:[%s3 + $0x28] sm:$0xf]
  %v1536 = vld [vmem:[%s3 + $0x2c] sm:$0xf]
  %v1537 = vld [vmem:[%s3 + $0x30] sm:$0xf]
  %v1538 = vld [vmem:[%s3 + $0x34] sm:$0xf]
  %v1539 = vld [vmem:[%s3 + $0x38] sm:$0xf]
  %v1540 = vld [vmem:[%s3 + $0x3c] sm:$0xf]
  %v1541 = vld [vmem:[%s4] sm:$0x1]
  %v1543 = vlaneseq
  %v1544 = vshrl.u32 %v1543, 7
  %v1545 = vsub.s32 0, %v1544
  %v1546 = vrot.slane %v1541, %v1545
  %v1556 = vunpack.c.l.b16 %v1517
  %v1557 = vunpack.c.l.b16 %v1518
  %v1558 = vunpack.c.l.b16 %v1519
  %v1559 = vunpack.c.l.b16 %v1520
  %v1560 = vunpack.c.l.b16 %v1521
  %v1561 = vunpack.c.l.b16 %v1522
  %v1562 = vunpack.c.l.b16 %v1523
  %v1563 = vunpack.c.l.b16 %v1524
  %vm1564 = vcmask 1041409
  %v1565 = vsel %vm1564, %v1557, %v1556
  %vm1566 = vcmask 1042434
  %v1567 = vsel %vm1566, %v1558, %v1565
  %vm1568 = vcmask 1043459
  %v1569 = vsel %vm1568, %v1559, %v1567
  %vm1570 = vcmask 1044484
  %v1571 = vsel %vm1570, %v1560, %v1569
  %vm1572 = vcmask 1045509
  %v1573 = vsel %vm1572, %v1561, %v1571
  %vm1574 = vcmask 1046534
  %v1575 = vsel %vm1574, %v1562, %v1573
  %vm1576 = vcmask 1047559
  %v1577 = vsel %vm1576, %v1563, %v1575
  %v1578 = vpack.c.b16 %v1577, %v1577
  %v1596 = vunpack.c.l.b16 %v1525
  %v1597 = vunpack.c.l.b16 %v1526
  %v1598 = vunpack.c.l.b16 %v1527
  %v1599 = vunpack.c.l.b16 %v1528
  %v1600 = vunpack.c.l.b16 %v1529
  %v1601 = vunpack.c.l.b16 %v1530
  %v1602 = vunpack.c.l.b16 %v1531
  %v1603 = vunpack.c.l.b16 %v1532
  %v1604 = vunpack.c.l.b16 %v1533
  %v1605 = vunpack.c.l.b16 %v1534
  %v1606 = vunpack.c.l.b16 %v1535
  %v1607 = vunpack.c.l.b16 %v1536
  %v1608 = vunpack.c.l.b16 %v1537
  %v1609 = vunpack.c.l.b16 %v1538
  %v1610 = vunpack.c.l.b16 %v1539
  %v1611 = vunpack.c.l.b16 %v1540
  %v1612 = vpack.c.b16 %v1597, %v1596
  %v1613 = vpack.c.b16 %v1599, %v1598
  %v1614 = vpack.c.b16 %v1601, %v1600
  %v1615 = vpack.c.b16 %v1603, %v1602
  %v1616 = vpack.c.b16 %v1605, %v1604
  %v1617 = vpack.c.b16 %v1607, %v1606
  %v1618 = vpack.c.b16 %v1609, %v1608
  %v1619 = vpack.c.b16 %v1611, %v1610
  %1628 = vmatprep.subr.bf16.mxu0 0
  %1629 = vmatpush1.bf16.msra.mxu0 %v1612
  %1630 = vmatprep.subr.bf16.mxu0 0
  %1631 = vmatpush1.bf16.msra.mxu0 %v1613
  %1632 = vmatprep.subr.bf16.mxu0 0
  %1633 = vmatpush1.bf16.msra.mxu0 %v1614
  %1634 = vmatprep.subr.bf16.mxu0 0
  %1635 = vmatpush1.bf16.msra.mxu0 %v1615
  %1636 = vmatprep.subr.bf16.mxu0 0
  %1637 = vmatpush1.bf16.msra.mxu0 %v1616
  %1638 = vmatprep.subr.bf16.mxu0 0
  %1639 = vmatpush1.bf16.msra.mxu0 %v1617
  %1640 = vmatprep.subr.bf16.mxu0 0
  %1641 = vmatpush1.bf16.msra.mxu0 %v1618
  %1642 = vmatprep.subr.bf16.mxu0 0
  %1643 = vmatpush1.bf16.msra.mxu0 %v1619
  %1644 = vmatprep.subr.bf16.mxu0 0
  %1645 = vmatpush1.bf16.msra.mxu0 0
  %1646 = vmatprep.subr.bf16.mxu0 0
  %1647 = vmatpush1.bf16.msra.mxu0 0
  %1648 = vmatprep.subr.bf16.mxu0 0
  %1649 = vmatpush1.bf16.msra.mxu0 0
  %1650 = vmatprep.subr.bf16.mxu0 0
  %1651 = vmatpush1.bf16.msra.mxu0 0
  %1652 = vmatprep.subr.bf16.mxu0 0
  %1653 = vmatpush1.bf16.msra.mxu0 0
  %1654 = vmatprep.subr.bf16.mxu0 0
  %1655 = vmatpush1.bf16.msra.mxu0 0
  %1656 = vmatprep.subr.bf16.mxu0 0
  %1657 = vmatpush1.bf16.msra.mxu0 0
  %1658 = vmatprep.subr.bf16.mxu0 0
  %1659 = vmatpush1.bf16.msra.mxu0 0
  %1660 = vmatprep.mubr.bf16.mxu0 0
  %1661 = vmatmul.mubr.bf16.gmra.mrb[0].mxu0 %v1578
  %v1662 = vpop.f32.mrb[0].mxu0
  %v1663 = vadd.f32 %v1546, %v1662
  %v1664 = vpop.f32.mrb[0].mxu0
  %v1665 = vpop.f32.mrb[0].mxu0
  %v1666 = vpop.f32.mrb[0].mxu0
  %1667 = vdwg.mxu0
  %1668 = vst [vmem:[%s5] sm:$0xff] %v1663
  // Predicated region
  $region22: #{cnn_discriminator_forward.1} parent=0 // pred_check
    _
  $region23: #{cnn_discriminator_forward.1} parent=0 // pred_check_branch
    %1670 = sbr.rel (0) target = $region25
  $region24: #{cnn_discriminator_forward.1} parent=0 // pred_region
    _
  $region25: #{cnn_discriminator_forward.1} parent=0 // pred_fallthru
    _
  // Predicated region
  $region26: #{cnn_discriminator_forward.1} parent=0 // pred_check
    _
  $region27: #{cnn_discriminator_forward.1} parent=0 // pred_check_branch
    %1672 = sbr.rel (0) target = $region29
  $region28: #{cnn_discriminator_forward.1} parent=0 // pred_region
    _
  $region29: #{cnn_discriminator_forward.1} parent=0 // pred_fallthru
    _

</llo_original>
